<compile_context>
chip_gen: v7x
topology: tpu7x:2x2x1
jax: 0.10.0
libtpu: 0.0.40
codegen_flags: <defaults>
</compile_context>

<pallas_src>
import jax
import jax.numpy as jnp
from jax.experimental import pallas as pl
from jax.experimental.pallas import tpu as pltpu

# Keep XLA-side matmuls (reference + hoisted i2h einsum) in full f32 so they
# agree with the kernel's f32 math to tight tolerance.
jax.config.update("jax_default_matmul_precision", "highest")

_SUBLANE = 8  # f32 sublane count


def attention_cell_kernel(
    feats_ref,       # (nBp, nT, nC)  batch-major feats
    fproj_ref,       # (nBp, nT, H)   precomputed i2h(feats) (hoisted, step-invariant)
    prev_h_ref,      # (nBp, H)
    emb_ref,         # (nBp, E)
    w_h2h_ref,       # (H, H)   == h2h.weight.T
    b_h2h_ref,       # (1, H)
    w_score_ref,     # (1, H)   == score.weight (row vector)
    w_ih_c_ref,      # (nC, 3H) == rnn.weight_ih[:, :nC].T
    w_ih_e_ref,      # (E, 3H)  == rnn.weight_ih[:, nC:].T
    b_ih_ref,        # (1, 3H)
    w_hh_ref,        # (H, 3H)  == rnn.weight_hh.T
    b_hh_ref,        # (1, 3H)
    hidden_out_ref,  # (nBp, H)
    alpha_out_ref,   # (nBp, nT)  lane-dense (time on the lane axis)
):
    H = prev_h_ref.shape[1]
    prev_h = prev_h_ref[...]

    # h2h(prev_hidden), broadcast over time.
    h_proj = (jnp.dot(prev_h, w_h2h_ref[...], preferred_element_type=jnp.float32)
              + b_h2h_ref[...])                                    # (nBp, H)

    # score(tanh(feats_proj + h_proj)) as VPU multiply + lane reduce; an MXU
    # matmul with output width 1 would be pure fixed latency in a masked layout.
    t = jnp.tanh(fproj_ref[...] + h_proj[:, None, :])              # (nBp, nT, H)
    emition = jnp.sum(t * w_score_ref[...], axis=-1)               # (nBp, nT)

    # softmax over the time axis (lane axis here).
    m = jnp.max(emition, axis=-1, keepdims=True)
    e = jnp.exp(emition - m)
    alpha = e / jnp.sum(e, axis=-1, keepdims=True)                 # (nBp, nT)
    alpha_out_ref[...] = alpha

    # context = sum_t alpha[t] * feats[t]
    context = jnp.sum(feats_ref[...] * alpha[:, :, None], axis=1)  # (nBp, nC)

    # GRUCell(concat([context, emb], 1), prev_h); concat avoided by splitting
    # the input-weight matmul (keeps operands lane-contiguous).
    gi = (jnp.dot(context, w_ih_c_ref[...], preferred_element_type=jnp.float32)
          + jnp.dot(emb_ref[...], w_ih_e_ref[...], preferred_element_type=jnp.float32)
          + b_ih_ref[...])                                         # (nBp, 3H)
    gh = (jnp.dot(prev_h, w_hh_ref[...], preferred_element_type=jnp.float32)
          + b_hh_ref[...])                                         # (nBp, 3H)

    r = jax.nn.sigmoid(gi[:, 0 * H:1 * H] + gh[:, 0 * H:1 * H])
    z = jax.nn.sigmoid(gi[:, 1 * H:2 * H] + gh[:, 1 * H:2 * H])
    n = jnp.tanh(gi[:, 2 * H:3 * H] + r * gh[:, 2 * H:3 * H])
    hidden_out_ref[...] = (1.0 - z) * n + z * prev_h


def _round_up(x, m):
    return (x + m - 1) // m * m


@jax.jit
def _attention_cell_jit(prev_hidden, feats, cur_embeddings, params):
    nT, nB, nC = feats.shape
    H = prev_hidden.shape[1]
    nBp = _round_up(nB, _SUBLANE)
    pad = nBp - nB
    f32 = jnp.float32

    feats = feats.astype(f32)
    prev_hidden = prev_hidden.astype(f32)
    cur_embeddings = cur_embeddings.astype(f32)

    # Batch-major + sublane padding of the batch dim.
    feats_bm = jnp.pad(jnp.transpose(feats, (1, 0, 2)), ((0, pad), (0, 0), (0, 0)))
    prev_h_p = jnp.pad(prev_hidden, ((0, pad), (0, 0)))
    emb_p = jnp.pad(cur_embeddings, ((0, pad), (0, 0)))

    # Hoisted decode-step-invariant projection: i2h(feats), once per sequence.
    w_i2h_t = params["w_i2h"].astype(f32).T                         # (nC, H)
    feats_proj = jnp.einsum("btc,ch->bth", feats_bm, w_i2h_t)       # (nBp, nT, H)

    args = (
        feats_bm,                                                   # 0
        feats_proj,                                                 # 1
        prev_h_p,                                                   # 2 (aliased -> out 0)
        emb_p,                                                      # 3
        params["w_h2h"].astype(f32).T,                              # 4
        params["b_h2h"].astype(f32).reshape(1, H),                  # 5
        params["w_score"].astype(f32).reshape(1, H),                # 6
        params["w_ih"][:, :nC].astype(f32).T,                       # 7
        params["w_ih"][:, nC:].astype(f32).T,                       # 8
        params["b_ih"].astype(f32).reshape(1, 3 * H),               # 9
        params["w_hh"].astype(f32).T,                               # 10
        params["b_hh"].astype(f32).reshape(1, 3 * H),               # 11
    )

    vmem_spec = pl.BlockSpec(memory_space=pltpu.MemorySpace.VMEM)
    out_shape = (
        jax.ShapeDtypeStruct((nBp, H), f32),    # cur_hidden (padded batch)
        jax.ShapeDtypeStruct((nBp, nT), f32),   # alpha, lane-dense batch-major
    )

    hidden_p, alpha_bt = pl.pallas_call(
        attention_cell_kernel,
        out_shape=out_shape,
        in_specs=[vmem_spec] * len(args),
        out_specs=(vmem_spec, vmem_spec),
        input_output_aliases={2: 0},   # prev_hidden buffer reused for cur_hidden
        compiler_params=pltpu.CompilerParams(vmem_limit_bytes=32 << 20),
    )(*args)

    cur_hidden = hidden_p[:nB]
    alpha = alpha_bt[:nB].T            # back to the module's (nT, nB) layout
    return cur_hidden, alpha


def attention_cell_forward(prev_hidden, feats, cur_embeddings, params):
    """AttentionCell forward (test=True semantics). Returns (cur_hidden, alpha)."""
    return _attention_cell_jit(prev_hidden, feats, cur_embeddings, params)


def _reference_forward(prev_hidden, feats, cur_embeddings, params):
    """Pure-JAX reference mirroring the PyTorch code (test=True path)."""
    nT, nB, nC = feats.shape
    H = prev_hidden.shape[1]
    feats_proj = feats.reshape(-1, nC) @ params["w_i2h"].T
    h_proj = prev_hidden @ params["w_h2h"].T + params["b_h2h"]
    emition = (jnp.tanh(feats_proj.reshape(nT, nB, H) + h_proj[None])
               .reshape(-1, H) @ params["w_score"].T).reshape(nT, nB)
    alpha = jax.nn.softmax(emition, axis=0)
    context = jnp.sum(feats * alpha[:, :, None], axis=0)
    x = jnp.concatenate([context, cur_embeddings], axis=1)
    gi = x @ params["w_ih"].T + params["b_ih"]
    gh = prev_hidden @ params["w_hh"].T + params["b_hh"]
    r = jax.nn.sigmoid(gi[:, :H] + gh[:, :H])
    z = jax.nn.sigmoid(gi[:, H:2 * H] + gh[:, H:2 * H])
    n = jnp.tanh(gi[:, 2 * H:] + r * gh[:, 2 * H:])
    return (1.0 - z) * n + z * prev_hidden, alpha


if __name__ == "__main__":
    # Small shapes consistent with the module's forward:
    nT, nB = 8, 2            # time steps, batch
    input_size = 16          # nC
    hidden_size = 32         # H
    num_embeddings = 32      # E

    key = jax.random.PRNGKey(0)
    keys = jax.random.split(key, 12)

    def init(k, shape, scale=0.1):
        return (scale * jax.random.normal(k, shape)).astype(jnp.float32)

    params = {
        "w_i2h":   init(keys[0], (hidden_size, input_size)),
        "w_h2h":   init(keys[1], (hidden_size, hidden_size)),
        "b_h2h":   init(keys[2], (hidden_size,)),
        "w_score": init(keys[3], (1, hidden_size)),
        "w_ih":    init(keys[4], (3 * hidden_size, input_size + num_embeddings)),
        "b_ih":    init(keys[5], (3 * hidden_size,)),
        "w_hh":    init(keys[6], (3 * hidden_size, hidden_size)),
        "b_hh":    init(keys[7], (3 * hidden_size,)),
    }

    feats = init(keys[8], (nT, nB, input_size), scale=1.0)
    prev_hidden = init(keys[9], (nB, hidden_size), scale=1.0)
    cur_embeddings = init(keys[10], (nB, num_embeddings), scale=1.0)

    cur_hidden, alpha = attention_cell_forward(prev_hidden, feats, cur_embeddings, params)
    cur_hidden = jax.block_until_ready(cur_hidden)
    alpha = jax.block_until_ready(alpha)

    ref_hidden, ref_alpha = _reference_forward(prev_hidden, feats, cur_embeddings, params)
    assert cur_hidden.shape == (nB, hidden_size)
    assert alpha.shape == (nT, nB)
    assert jnp.allclose(cur_hidden, ref_hidden, atol=1e-5, rtol=1e-5)
    assert jnp.allclose(alpha, ref_alpha, atol=1e-5, rtol=1e-5)

    print("KERNEL_OK")
</pallas_src>

<mosaic_0001>
module attributes {stable_mosaic.version = 11 : i64} {
  func.func @attention_cell_kernel(%arg0: memref<8x8x16xf32, #tpu.memory_space<vmem>>, %arg1: memref<8x8x32xf32, #tpu.memory_space<vmem>>, %arg2: memref<8x32xf32, #tpu.memory_space<vmem>>, %arg3: memref<8x32xf32, #tpu.memory_space<vmem>>, %arg4: memref<32x32xf32, #tpu.memory_space<vmem>>, %arg5: memref<1x32xf32, #tpu.memory_space<vmem>>, %arg6: memref<1x32xf32, #tpu.memory_space<vmem>>, %arg7: memref<16x96xf32, #tpu.memory_space<vmem>>, %arg8: memref<32x96xf32, #tpu.memory_space<vmem>>, %arg9: memref<1x96xf32, #tpu.memory_space<vmem>>, %arg10: memref<32x96xf32, #tpu.memory_space<vmem>>, %arg11: memref<1x96xf32, #tpu.memory_space<vmem>>, %arg12: memref<8x32xf32, #tpu.memory_space<vmem>>, %arg13: memref<8x8xf32, #tpu.memory_space<vmem>>) attributes {dimension_semantics = [], scalar_prefetch = 0 : i64, scratch_operands = 0 : i64, tpu.core_type = #tpu.core_type<tc>} {
    %c0 = arith.constant 0 : index
    %c0_0 = arith.constant 0 : index
    %0 = vector.load %arg2[%c0, %c0_0] : memref<8x32xf32, #tpu.memory_space<vmem>>, vector<8x32xf32>
    %c0_1 = arith.constant 0 : index
    %c0_2 = arith.constant 0 : index
    %1 = vector.load %arg4[%c0_1, %c0_2] : memref<32x32xf32, #tpu.memory_space<vmem>>, vector<32x32xf32>
    %cst = arith.constant dense<0.000000e+00> : vector<8x32xf32>
    %2 = tpu.matmul %0, %1, %cst {dimension_numbers = #tpu.dot_dimension_numbers<[1], [0], [0], [1], [0, 0, 1, 1], [], []>, precision = #tpu.contract_precision<fp32>} : vector<8x32xf32>, vector<32x32xf32>, vector<8x32xf32> -> vector<8x32xf32>
    %c0_3 = arith.constant 0 : index
    %c0_4 = arith.constant 0 : index
    %3 = vector.load %arg5[%c0_3, %c0_4] : memref<1x32xf32, #tpu.memory_space<vmem>>, vector<1x32xf32>
    %4 = vector.broadcast %3 : vector<1x32xf32> to vector<8x32xf32>
    %5 = arith.addf %2, %4 : vector<8x32xf32>
    %c0_5 = arith.constant 0 : index
    %c0_6 = arith.constant 0 : index
    %c0_7 = arith.constant 0 : index
    %6 = vector.load %arg1[%c0_5, %c0_6, %c0_7] : memref<8x8x32xf32, #tpu.memory_space<vmem>>, vector<8x8x32xf32>
    %7 = vector.shape_cast %5 : vector<8x32xf32> to vector<8x1x32xf32>
    %8 = vector.broadcast %7 : vector<8x1x32xf32> to vector<8x8x32xf32>
    %9 = arith.addf %6, %8 : vector<8x8x32xf32>
    %10 = math.tanh %9 : vector<8x8x32xf32>
    %c0_8 = arith.constant 0 : index
    %c0_9 = arith.constant 0 : index
    %11 = vector.load %arg6[%c0_8, %c0_9] : memref<1x32xf32, #tpu.memory_space<vmem>>, vector<1x32xf32>
    %12 = vector.shape_cast %11 : vector<1x32xf32> to vector<1x1x32xf32>
    %13 = vector.broadcast %12 : vector<1x1x32xf32> to vector<8x8x32xf32>
    %14 = arith.mulf %10, %13 : vector<8x8x32xf32>
    %cst_10 = arith.constant dense<0.000000e+00> : vector<8x8xf32>
    %15 = vector.multi_reduction <add>, %14, %cst_10 [2] : vector<8x8x32xf32> to vector<8x8xf32>
    %cst_11 = arith.constant dense<0xFF800000> : vector<8xf32>
    %16 = vector.multi_reduction <maximumf>, %15, %cst_11 [1] : vector<8x8xf32> to vector<8xf32>
    %17 = vector.shape_cast %16 : vector<8xf32> to vector<8x1xf32>
    %18 = vector.broadcast %17 : vector<8x1xf32> to vector<8x8xf32>
    %19 = arith.subf %15, %18 : vector<8x8xf32>
    %20 = math.exp %19 : vector<8x8xf32>
    %cst_12 = arith.constant dense<0.000000e+00> : vector<8xf32>
    %21 = vector.multi_reduction <add>, %20, %cst_12 [1] : vector<8x8xf32> to vector<8xf32>
    %22 = vector.shape_cast %21 : vector<8xf32> to vector<8x1xf32>
    %23 = vector.broadcast %22 : vector<8x1xf32> to vector<8x8xf32>
    %24 = arith.divf %20, %23 : vector<8x8xf32>
    %c0_13 = arith.constant 0 : index
    %c0_14 = arith.constant 0 : index
    %25 = vector.load %arg13[%c0_13, %c0_14] : memref<8x8xf32, #tpu.memory_space<vmem>>, vector<8x8xf32>
    tpu.vector_store %arg13[%c0_13, %c0_14], %24 {strides = array<i32>} : memref<8x8xf32, #tpu.memory_space<vmem>>, vector<8x8xf32>,
    %c0_15 = arith.constant 0 : index
    %c0_16 = arith.constant 0 : index
    %c0_17 = arith.constant 0 : index
    %26 = vector.load %arg0[%c0_15, %c0_16, %c0_17] : memref<8x8x16xf32, #tpu.memory_space<vmem>>, vector<8x8x16xf32>
    %27 = vector.shape_cast %24 : vector<8x8xf32> to vector<8x8x1xf32>
    %28 = vector.broadcast %27 : vector<8x8x1xf32> to vector<8x8x16xf32>
    %29 = arith.mulf %26, %28 : vector<8x8x16xf32>
    %cst_18 = arith.constant dense<0.000000e+00> : vector<8x16xf32>
    %30 = vector.multi_reduction <add>, %29, %cst_18 [1] : vector<8x8x16xf32> to vector<8x16xf32>
    %c0_19 = arith.constant 0 : index
    %c0_20 = arith.constant 0 : index
    %31 = vector.load %arg7[%c0_19, %c0_20] : memref<16x96xf32, #tpu.memory_space<vmem>>, vector<16x96xf32>
    %cst_21 = arith.constant dense<0.000000e+00> : vector<8x96xf32>
    %32 = tpu.matmul %30, %31, %cst_21 {dimension_numbers = #tpu.dot_dimension_numbers<[1], [0], [0], [1], [0, 0, 1, 1], [], []>, precision = #tpu.contract_precision<fp32>} : vector<8x16xf32>, vector<16x96xf32>, vector<8x96xf32> -> vector<8x96xf32>
    %c0_22 = arith.constant 0 : index
    %c0_23 = arith.constant 0 : index
    %33 = vector.load %arg3[%c0_22, %c0_23] : memref<8x32xf32, #tpu.memory_space<vmem>>, vector<8x32xf32>
    %c0_24 = arith.constant 0 : index
    %c0_25 = arith.constant 0 : index
    %34 = vector.load %arg8[%c0_24, %c0_25] : memref<32x96xf32, #tpu.memory_space<vmem>>, vector<32x96xf32>
    %cst_26 = arith.constant dense<0.000000e+00> : vector<8x96xf32>
    %35 = tpu.matmul %33, %34, %cst_26 {dimension_numbers = #tpu.dot_dimension_numbers<[1], [0], [0], [1], [0, 0, 1, 1], [], []>, precision = #tpu.contract_precision<fp32>} : vector<8x32xf32>, vector<32x96xf32>, vector<8x96xf32> -> vector<8x96xf32>
    %36 = arith.addf %32, %35 : vector<8x96xf32>
    %c0_27 = arith.constant 0 : index
    %c0_28 = arith.constant 0 : index
    %37 = vector.load %arg9[%c0_27, %c0_28] : memref<1x96xf32, #tpu.memory_space<vmem>>, vector<1x96xf32>
    %38 = vector.broadcast %37 : vector<1x96xf32> to vector<8x96xf32>
    %39 = arith.addf %36, %38 : vector<8x96xf32>
    %c0_29 = arith.constant 0 : index
    %c0_30 = arith.constant 0 : index
    %40 = vector.load %arg10[%c0_29, %c0_30] : memref<32x96xf32, #tpu.memory_space<vmem>>, vector<32x96xf32>
    %cst_31 = arith.constant dense<0.000000e+00> : vector<8x96xf32>
    %41 = tpu.matmul %0, %40, %cst_31 {dimension_numbers = #tpu.dot_dimension_numbers<[1], [0], [0], [1], [0, 0, 1, 1], [], []>, precision = #tpu.contract_precision<fp32>} : vector<8x32xf32>, vector<32x96xf32>, vector<8x96xf32> -> vector<8x96xf32>
    %c0_32 = arith.constant 0 : index
    %c0_33 = arith.constant 0 : index
    %42 = vector.load %arg11[%c0_32, %c0_33] : memref<1x96xf32, #tpu.memory_space<vmem>>, vector<1x96xf32>
    %43 = vector.broadcast %42 : vector<1x96xf32> to vector<8x96xf32>
    %44 = arith.addf %41, %43 : vector<8x96xf32>
    %45 = vector.extract_strided_slice %39 {offsets = [0, 0], sizes = [8, 32], strides = [1, 1]} : vector<8x96xf32> to vector<8x32xf32>
    %46 = vector.extract_strided_slice %44 {offsets = [0, 0], sizes = [8, 32], strides = [1, 1]} : vector<8x96xf32> to vector<8x32xf32>
    %47 = arith.addf %45, %46 : vector<8x32xf32>
    %48 = arith.negf %47 : vector<8x32xf32>
    %49 = math.exp %48 : vector<8x32xf32>
    %cst_34 = arith.constant 1.000000e+00 : f32
    %50 = vector.broadcast %cst_34 : f32 to vector<8x32xf32>
    %51 = arith.addf %50, %49 : vector<8x32xf32>
    %52 = arith.divf %50, %51 : vector<8x32xf32>
    %53 = vector.extract_strided_slice %39 {offsets = [0, 32], sizes = [8, 32], strides = [1, 1]} : vector<8x96xf32> to vector<8x32xf32>
    %54 = vector.extract_strided_slice %44 {offsets = [0, 32], sizes = [8, 32], strides = [1, 1]} : vector<8x96xf32> to vector<8x32xf32>
    %55 = arith.addf %53, %54 : vector<8x32xf32>
    %56 = arith.negf %55 : vector<8x32xf32>
    %57 = math.exp %56 : vector<8x32xf32>
    %cst_35 = arith.constant 1.000000e+00 : f32
    %58 = vector.broadcast %cst_35 : f32 to vector<8x32xf32>
    %59 = arith.addf %58, %57 : vector<8x32xf32>
    %60 = arith.divf %58, %59 : vector<8x32xf32>
    %61 = vector.extract_strided_slice %39 {offsets = [0, 64], sizes = [8, 32], strides = [1, 1]} : vector<8x96xf32> to vector<8x32xf32>
    %62 = vector.extract_strided_slice %44 {offsets = [0, 64], sizes = [8, 32], strides = [1, 1]} : vector<8x96xf32> to vector<8x32xf32>
    %63 = arith.mulf %52, %62 : vector<8x32xf32>
    %64 = arith.addf %61, %63 : vector<8x32xf32>
    %65 = math.tanh %64 : vector<8x32xf32>
    %cst_36 = arith.constant 1.000000e+00 : f32
    %66 = vector.broadcast %cst_36 : f32 to vector<8x32xf32>
    %67 = arith.subf %66, %60 : vector<8x32xf32>
    %68 = arith.mulf %67, %65 : vector<8x32xf32>
    %69 = arith.mulf %60, %0 : vector<8x32xf32>
    %70 = arith.addf %68, %69 : vector<8x32xf32>
    %c0_37 = arith.constant 0 : index
    %c0_38 = arith.constant 0 : index
    %71 = vector.load %arg12[%c0_37, %c0_38] : memref<8x32xf32, #tpu.memory_space<vmem>>, vector<8x32xf32>
    tpu.vector_store %arg12[%c0_37, %c0_38], %70 {strides = array<i32>} : memref<8x32xf32, #tpu.memory_space<vmem>>, vector<8x32xf32>,
    return
  }
}

</mosaic_0001>

<llo_original>
// kernel: _attention_cell_jit.1
$region0: #{_attention_cell_jit.1}
  #allocation0 [shape = 'u32[]', space=smem, size = 0x4, offset = 0x4, fixed_abs, tag = 'smem constant byte address 0x4 - core index']
  #allocation1 [shape = 'u32[144,128]{1,0:T(1,128)}', space=vmem, size = 0x12000, scoped, tag = 'internal scratch']
  %s0 = inlined_call_operand.vmem [shape: f32[8,8,16], index: 0, kind: input, shape index: {}]
  %s1 = inlined_call_operand.vmem [shape: f32[8,8,32], index: 1, kind: input, shape index: {}]
  %s2 = inlined_call_operand.vmem [shape: f32[8,32], index: 2, kind: input, shape index: {}, may-alias: {2,12}]
  %s3 = inlined_call_operand.vmem [shape: f32[8,32], index: 3, kind: input, shape index: {}]
  %s4 = inlined_call_operand.vmem [shape: f32[32,32], index: 4, kind: input, shape index: {}]
  %s5 = inlined_call_operand.vmem [shape: f32[1,32], index: 5, kind: input, shape index: {}]
  %s6 = inlined_call_operand.vmem [shape: f32[1,32], index: 6, kind: input, shape index: {}]
  %s7 = inlined_call_operand.vmem [shape: f32[16,96], index: 7, kind: input, shape index: {}]
  %s8 = inlined_call_operand.vmem [shape: f32[32,96], index: 8, kind: input, shape index: {}]
  %s9 = inlined_call_operand.vmem [shape: f32[1,96], index: 9, kind: input, shape index: {}]
  %s10 = inlined_call_operand.vmem [shape: f32[32,96], index: 10, kind: input, shape index: {}]
  %s11 = inlined_call_operand.vmem [shape: f32[1,96], index: 11, kind: input, shape index: {}]
  %s12 = inlined_call_operand.vmem [shape: f32[8,32], index: 12, kind: output, shape index: {0}, may-alias: {2,12}]
  %s13 = inlined_call_operand.vmem [shape: f32[8,8], index: 13, kind: output, shape index: {1}]
  %14 = xla_tuple %s12, %s13
  %s15 = sld [smem:[#allocation0]]
  $region66: #{_attention_cell_jit.1} parent=0
    _
  %s17 = ssub.s32 1, %s15
  %s18 = scalar_select 0, %s17, %s15
  // Predicated region
  $region2: #{_attention_cell_jit.1} parent=0 // pred_check
    _
  $region3: #{_attention_cell_jit.1} parent=0 // pred_check_branch
    %20 = sbr.rel (0) target = $region5
  $region4: #{_attention_cell_jit.1} parent=0 // pred_region
    _
  $region5: #{_attention_cell_jit.1} parent=0 // pred_fallthru
    _
  // Predicated region
  $region6: #{_attention_cell_jit.1} parent=0 // pred_check
    _
  $region7: #{_attention_cell_jit.1} parent=0 // pred_check_branch
    %22 = sbr.rel (0) target = $region9
  $region8: #{_attention_cell_jit.1} parent=0 // pred_region
    _
  $region9: #{_attention_cell_jit.1} parent=0 // pred_fallthru
    _
  // Predicated region
  $region10: #{_attention_cell_jit.1} parent=0 // pred_check
    _
  $region11: #{_attention_cell_jit.1} parent=0 // pred_check_branch
    %24 = sbr.rel (0) target = $region13
  $region12: #{_attention_cell_jit.1} parent=0 // pred_region
    _
  $region13: #{_attention_cell_jit.1} parent=0 // pred_fallthru
    _
  // Predicated region
  $region14: #{_attention_cell_jit.1} parent=0 // pred_check
    _
  $region15: #{_attention_cell_jit.1} parent=0 // pred_check_branch
    %26 = sbr.rel (0) target = $region17
  $region16: #{_attention_cell_jit.1} parent=0 // pred_region
    _
  $region17: #{_attention_cell_jit.1} parent=0 // pred_fallthru
    _
  // Predicated region
  $region18: #{_attention_cell_jit.1} parent=0 // pred_check
    _
  $region19: #{_attention_cell_jit.1} parent=0 // pred_check_branch
    %28 = sbr.rel (0) target = $region21
  $region20: #{_attention_cell_jit.1} parent=0 // pred_region
    _
  $region21: #{_attention_cell_jit.1} parent=0 // pred_fallthru
    _
  // Predicated region
  $region22: #{_attention_cell_jit.1} parent=0 // pred_check
    _
  $region23: #{_attention_cell_jit.1} parent=0 // pred_check_branch
    %30 = sbr.rel (0) target = $region25
  $region24: #{_attention_cell_jit.1} parent=0 // pred_region
    _
  $region25: #{_attention_cell_jit.1} parent=0 // pred_fallthru
    _
  // Predicated region
  $region26: #{_attention_cell_jit.1} parent=0 // pred_check
    _
  $region27: #{_attention_cell_jit.1} parent=0 // pred_check_branch
    %32 = sbr.rel (0) target = $region29
  $region28: #{_attention_cell_jit.1} parent=0 // pred_region
    _
  $region29: #{_attention_cell_jit.1} parent=0 // pred_fallthru
    _
  // Predicated region
  $region30: #{_attention_cell_jit.1} parent=0 // pred_check
    _
  $region31: #{_attention_cell_jit.1} parent=0 // pred_check_branch
    %34 = sbr.rel (0) target = $region33
  $region32: #{_attention_cell_jit.1} parent=0 // pred_region
    _
  $region33: #{_attention_cell_jit.1} parent=0 // pred_fallthru
    _
  // Predicated region
  $region34: #{_attention_cell_jit.1} parent=0 // pred_check
    _
  $region35: #{_attention_cell_jit.1} parent=0 // pred_check_branch
    %36 = sbr.rel (0) target = $region37
  $region36: #{_attention_cell_jit.1} parent=0 // pred_region
    _
  $region37: #{_attention_cell_jit.1} parent=0 // pred_fallthru
    _
  // Predicated region
  $region38: #{_attention_cell_jit.1} parent=0 // pred_check
    _
  $region39: #{_attention_cell_jit.1} parent=0 // pred_check_branch
    %38 = sbr.rel (0) target = $region41
  $region40: #{_attention_cell_jit.1} parent=0 // pred_region
    _
  $region41: #{_attention_cell_jit.1} parent=0 // pred_fallthru
    _
  // Predicated region
  $region42: #{_attention_cell_jit.1} parent=0 // pred_check
    _
  $region43: #{_attention_cell_jit.1} parent=0 // pred_check_branch
    %40 = sbr.rel (0) target = $region45
  $region44: #{_attention_cell_jit.1} parent=0 // pred_region
    _
  $region45: #{_attention_cell_jit.1} parent=0 // pred_fallthru
    _
  // Predicated region
  $region46: #{_attention_cell_jit.1} parent=0 // pred_check
    _
  $region47: #{_attention_cell_jit.1} parent=0 // pred_check_branch
    %42 = sbr.rel (0) target = $region49
  $region48: #{_attention_cell_jit.1} parent=0 // pred_region
    _
  $region49: #{_attention_cell_jit.1} parent=0 // pred_fallthru
    _
  %v43 = vld [vmem:[%s2] sm:$0xff]
  %v44 = vld [vmem:[%s4] sm:$0xff]
  %v45 = vld [vmem:[%s4 + $0x8] sm:$0xff]
  %v46 = vld [vmem:[%s4 + $0x10] sm:$0xff]
  %v47 = vld [vmem:[%s4 + $0x18] sm:$0xff]
  %v48 = vld [vmem:[%s5] sm:$0x1]
  %v50 = vlaneseq
  %v51 = vshrl.u32 %v50, 7
  %v52 = vsub.s32 0, %v51
  %v53 = vrot.slane %v48, %v52
  %vm55 = vcmask 261120
  %v57 = vsel %vm55, %v43, 0
  %59 = vmatprep.subr.mxu0 0.0
  %v60 = vand.u32 %v44, 4294901760
  %61 = vmatpush1.msra.mxu0 %v60
  %62 = vmatprep.subr.mxu0 0.0
  %v63 = vand.u32 %v45, 4294901760
  %64 = vmatpush1.msra.mxu0 %v63
  %65 = vmatprep.subr.mxu0 0.0
  %v66 = vand.u32 %v46, 4294901760
  %67 = vmatpush1.msra.mxu0 %v66
  %68 = vmatprep.subr.mxu0 0.0
  %v69 = vand.u32 %v47, 4294901760
  %70 = vmatpush1.msra.mxu0 %v69
  %71 = vmatprep.subr.mxu0 0.0
  %72 = vmatpush1.msra.mxu0 0.0
  %73 = vmatprep.subr.mxu0 0.0
  %74 = vmatpush1.msra.mxu0 0.0
  %75 = vmatprep.subr.mxu0 0.0
  %76 = vmatpush1.msra.mxu0 0.0
  %77 = vmatprep.subr.mxu0 0.0
  %78 = vmatpush1.msra.mxu0 0.0
  %79 = vmatprep.subr.mxu0 0.0
  %80 = vmatpush1.msra.mxu0 0.0
  %81 = vmatprep.subr.mxu0 0.0
  %82 = vmatpush1.msra.mxu0 0.0
  %83 = vmatprep.subr.mxu0 0.0
  %84 = vmatpush1.msra.mxu0 0.0
  %85 = vmatprep.subr.mxu0 0.0
  %86 = vmatpush1.msra.mxu0 0.0
  %87 = vmatprep.subr.mxu0 0.0
  %88 = vmatpush1.msra.mxu0 0.0
  %89 = vmatprep.subr.mxu0 0.0
  %90 = vmatpush1.msra.mxu0 0.0
  %91 = vmatprep.subr.mxu0 0.0
  %92 = vmatpush1.msra.mxu0 0.0
  %93 = vmatprep.subr.mxu0 0.0
  %94 = vmatpush1.msra.mxu0 0.0
  %95 = vmatprep.subr.mxu0 0.0
  %96 = vmatpush1.msra.mxu0 0.0
  %97 = vmatprep.subr.mxu0 0.0
  %98 = vmatpush1.msra.mxu0 0.0
  %99 = vmatprep.subr.mxu0 0.0
  %100 = vmatpush1.msra.mxu0 0.0
  %101 = vmatprep.subr.mxu0 0.0
  %102 = vmatpush1.msra.mxu0 0.0
  %103 = vmatprep.subr.mxu0 0.0
  %104 = vmatpush1.msra.mxu0 0.0
  %105 = vmatprep.subr.mxu0 0.0
  %106 = vmatpush1.msra.mxu0 0.0
  %107 = vmatprep.subr.mxu0 0.0
  %108 = vmatpush1.msra.mxu0 0.0
  %109 = vmatprep.subr.mxu0 0.0
  %110 = vmatpush1.msra.mxu0 0.0
  %111 = vmatprep.subr.mxu0 0.0
  %112 = vmatpush1.msra.mxu0 0.0
  %113 = vmatprep.subr.mxu0 0.0
  %114 = vmatpush1.msra.mxu0 0.0
  %115 = vmatprep.subr.mxu0 0.0
  %116 = vmatpush1.msra.mxu0 0.0
  %117 = vmatprep.subr.mxu0 0.0
  %118 = vmatpush1.msra.mxu0 0.0
  %119 = vmatprep.subr.mxu0 0.0
  %120 = vmatpush1.msra.mxu0 0.0
  %121 = vmatprep.subr.mxu0 0.0
  %122 = vmatpush1.msra.mxu0 0.0
  %123 = vmatprep.subr.mxu0 0.0
  %124 = vmatpush1.msra.mxu0 0.0
  %125 = vmatprep.subr.mxu0 0.0
  %126 = vmatpush1.msra.mxu0 0.0
  %127 = vmatprep.mubr.f32.mxu0 0.0
  %v128 = vand.u32 %v57, 4294901760
  %v129 = vsub.f32 %v57, %v128
  %v130 = vand.u32 %v129, 4294901760
  %v131 = vsub.f32 %v129, %v130
  %v132 = vand.u32 %v131, 4294901760
  %133 = vmatmul.mubr.f32.gmra.mrb[0].mxu0 %v132
  %v134 = vpop.f32.mrb[0].mxu0
  %v135 = vadd.f32 %v53, %v134
  %v136 = vpop.f32.mrb[0].mxu0
  %137 = vdwg.mxu0
  %138 = vmatprep.subr.mxu0 0.0
  %v139 = vand.u32 %v44, 4294901760
  %v140 = vsub.f32 %v44, %v139
  %v141 = vand.u32 %v140, 4294901760
  %v142 = vsub.f32 %v140, %v141
  %v143 = vand.u32 %v142, 4294901760
  %144 = vmatpush1.msra.mxu0 %v143
  %145 = vmatprep.subr.mxu0 0.0
  %v146 = vand.u32 %v45, 4294901760
  %v147 = vsub.f32 %v45, %v146
  %v148 = vand.u32 %v147, 4294901760
  %v149 = vsub.f32 %v147, %v148
  %v150 = vand.u32 %v149, 4294901760
  %151 = vmatpush1.msra.mxu0 %v150
  %152 = vmatprep.subr.mxu0 0.0
  %v153 = vand.u32 %v46, 4294901760
  %v154 = vsub.f32 %v46, %v153
  %v155 = vand.u32 %v154, 4294901760
  %v156 = vsub.f32 %v154, %v155
  %v157 = vand.u32 %v156, 4294901760
  %158 = vmatpush1.msra.mxu0 %v157
  %159 = vmatprep.subr.mxu0 0.0
  %v160 = vand.u32 %v47, 4294901760
  %v161 = vsub.f32 %v47, %v160
  %v162 = vand.u32 %v161, 4294901760
  %v163 = vsub.f32 %v161, %v162
  %v164 = vand.u32 %v163, 4294901760
  %165 = vmatpush1.msra.mxu0 %v164
  %166 = vmatprep.subr.mxu0 0.0
  %167 = vmatpush1.msra.mxu0 0.0
  %168 = vmatprep.subr.mxu0 0.0
  %169 = vmatpush1.msra.mxu0 0.0
  %170 = vmatprep.subr.mxu0 0.0
  %171 = vmatpush1.msra.mxu0 0.0
  %172 = vmatprep.subr.mxu0 0.0
  %173 = vmatpush1.msra.mxu0 0.0
  %174 = vmatprep.subr.mxu0 0.0
  %175 = vmatpush1.msra.mxu0 0.0
  %176 = vmatprep.subr.mxu0 0.0
  %177 = vmatpush1.msra.mxu0 0.0
  %178 = vmatprep.subr.mxu0 0.0
  %179 = vmatpush1.msra.mxu0 0.0
  %180 = vmatprep.subr.mxu0 0.0
  %181 = vmatpush1.msra.mxu0 0.0
  %182 = vmatprep.subr.mxu0 0.0
  %183 = vmatpush1.msra.mxu0 0.0
  %184 = vmatprep.subr.mxu0 0.0
  %185 = vmatpush1.msra.mxu0 0.0
  %186 = vmatprep.subr.mxu0 0.0
  %187 = vmatpush1.msra.mxu0 0.0
  %188 = vmatprep.subr.mxu0 0.0
  %189 = vmatpush1.msra.mxu0 0.0
  %190 = vmatprep.subr.mxu0 0.0
  %191 = vmatpush1.msra.mxu0 0.0
  %192 = vmatprep.subr.mxu0 0.0
  %193 = vmatpush1.msra.mxu0 0.0
  %194 = vmatprep.subr.mxu0 0.0
  %195 = vmatpush1.msra.mxu0 0.0
  %196 = vmatprep.subr.mxu0 0.0
  %197 = vmatpush1.msra.mxu0 0.0
  %198 = vmatprep.subr.mxu0 0.0
  %199 = vmatpush1.msra.mxu0 0.0
  %200 = vmatprep.subr.mxu0 0.0
  %201 = vmatpush1.msra.mxu0 0.0
  %202 = vmatprep.subr.mxu0 0.0
  %203 = vmatpush1.msra.mxu0 0.0
  %204 = vmatprep.subr.mxu0 0.0
  %205 = vmatpush1.msra.mxu0 0.0
  %206 = vmatprep.subr.mxu0 0.0
  %207 = vmatpush1.msra.mxu0 0.0
  %208 = vmatprep.subr.mxu0 0.0
  %209 = vmatpush1.msra.mxu0 0.0
  %210 = vmatprep.subr.mxu0 0.0
  %211 = vmatpush1.msra.mxu0 0.0
  %212 = vmatprep.subr.mxu0 0.0
  %213 = vmatpush1.msra.mxu0 0.0
  %214 = vmatprep.subr.mxu0 0.0
  %215 = vmatpush1.msra.mxu0 0.0
  %216 = vmatprep.subr.mxu0 0.0
  %217 = vmatpush1.msra.mxu0 0.0
  %218 = vmatprep.subr.mxu0 0.0
  %219 = vmatpush1.msra.mxu0 0.0
  %220 = vmatprep.subr.mxu0 0.0
  %221 = vmatpush1.msra.mxu0 0.0
  %222 = vmatprep.mubr.f32.mxu0 0.0
  %v223 = vand.u32 %v57, 4294901760
  %224 = vmatmul.mubr.f32.gmra.mrb[0].mxu0 %v223
  %v225 = vpop.f32.mrb[0].mxu0
  %v226 = vadd.f32 %v135, %v225
  %v227 = vpop.f32.mrb[0].mxu0
  %228 = vdwg.mxu0
  %229 = vmatprep.subr.mxu0 0.0
  %v230 = vand.u32 %v44, 4294901760
  %v231 = vsub.f32 %v44, %v230
  %232 = vmatpush1.msra.mxu0 %v231
  %233 = vmatprep.subr.mxu0 0.0
  %v234 = vand.u32 %v45, 4294901760
  %v235 = vsub.f32 %v45, %v234
  %236 = vmatpush1.msra.mxu0 %v235
  %237 = vmatprep.subr.mxu0 0.0
  %v238 = vand.u32 %v46, 4294901760
  %v239 = vsub.f32 %v46, %v238
  %240 = vmatpush1.msra.mxu0 %v239
  %241 = vmatprep.subr.mxu0 0.0
  %v242 = vand.u32 %v47, 4294901760
  %v243 = vsub.f32 %v47, %v242
  %244 = vmatpush1.msra.mxu0 %v243
  %245 = vmatprep.subr.mxu0 0.0
  %246 = vmatpush1.msra.mxu0 0.0
  %247 = vmatprep.subr.mxu0 0.0
  %248 = vmatpush1.msra.mxu0 0.0
  %249 = vmatprep.subr.mxu0 0.0
  %250 = vmatpush1.msra.mxu0 0.0
  %251 = vmatprep.subr.mxu0 0.0
  %252 = vmatpush1.msra.mxu0 0.0
  %253 = vmatprep.subr.mxu0 0.0
  %254 = vmatpush1.msra.mxu0 0.0
  %255 = vmatprep.subr.mxu0 0.0
  %256 = vmatpush1.msra.mxu0 0.0
  %257 = vmatprep.subr.mxu0 0.0
  %258 = vmatpush1.msra.mxu0 0.0
  %259 = vmatprep.subr.mxu0 0.0
  %260 = vmatpush1.msra.mxu0 0.0
  %261 = vmatprep.subr.mxu0 0.0
  %262 = vmatpush1.msra.mxu0 0.0
  %263 = vmatprep.subr.mxu0 0.0
  %264 = vmatpush1.msra.mxu0 0.0
  %265 = vmatprep.subr.mxu0 0.0
  %266 = vmatpush1.msra.mxu0 0.0
  %267 = vmatprep.subr.mxu0 0.0
  %268 = vmatpush1.msra.mxu0 0.0
  %269 = vmatprep.subr.mxu0 0.0
  %270 = vmatpush1.msra.mxu0 0.0
  %271 = vmatprep.subr.mxu0 0.0
  %272 = vmatpush1.msra.mxu0 0.0
  %273 = vmatprep.subr.mxu0 0.0
  %274 = vmatpush1.msra.mxu0 0.0
  %275 = vmatprep.subr.mxu0 0.0
  %276 = vmatpush1.msra.mxu0 0.0
  %277 = vmatprep.subr.mxu0 0.0
  %278 = vmatpush1.msra.mxu0 0.0
  %279 = vmatprep.subr.mxu0 0.0
  %280 = vmatpush1.msra.mxu0 0.0
  %281 = vmatprep.subr.mxu0 0.0
  %282 = vmatpush1.msra.mxu0 0.0
  %283 = vmatprep.subr.mxu0 0.0
  %284 = vmatpush1.msra.mxu0 0.0
  %285 = vmatprep.subr.mxu0 0.0
  %286 = vmatpush1.msra.mxu0 0.0
  %287 = vmatprep.subr.mxu0 0.0
  %288 = vmatpush1.msra.mxu0 0.0
  %289 = vmatprep.subr.mxu0 0.0
  %290 = vmatpush1.msra.mxu0 0.0
  %291 = vmatprep.subr.mxu0 0.0
  %292 = vmatpush1.msra.mxu0 0.0
  %293 = vmatprep.subr.mxu0 0.0
  %294 = vmatpush1.msra.mxu0 0.0
  %295 = vmatprep.subr.mxu0 0.0
  %296 = vmatpush1.msra.mxu0 0.0
  %297 = vmatprep.subr.mxu0 0.0
  %298 = vmatpush1.msra.mxu0 0.0
  %299 = vmatprep.subr.mxu0 0.0
  %300 = vmatpush1.msra.mxu0 0.0
  %301 = vmatprep.mubr.f32.mxu0 0.0
  %v302 = vand.u32 %v57, 4294901760
  %v303 = vsub.f32 %v57, %v302
  %304 = vmatmul.mubr.f32.gmra.mrb[0].mxu0 %v303
  %v305 = vpop.f32.mrb[0].mxu0
  %v306 = vadd.f32 %v226, %v305
  %v307 = vpop.f32.mrb[0].mxu0
  %308 = vdwg.mxu0
  %309 = vmatprep.subr.mxu0 0.0
  %v310 = vand.u32 %v44, 4294901760
  %311 = vmatpush1.msra.mxu0 %v310
  %312 = vmatprep.subr.mxu0 0.0
  %v313 = vand.u32 %v45, 4294901760
  %314 = vmatpush1.msra.mxu0 %v313
  %315 = vmatprep.subr.mxu0 0.0
  %v316 = vand.u32 %v46, 4294901760
  %317 = vmatpush1.msra.mxu0 %v316
  %318 = vmatprep.subr.mxu0 0.0
  %v319 = vand.u32 %v47, 4294901760
  %320 = vmatpush1.msra.mxu0 %v319
  %321 = vmatprep.subr.mxu0 0.0
  %322 = vmatpush1.msra.mxu0 0.0
  %323 = vmatprep.subr.mxu0 0.0
  %324 = vmatpush1.msra.mxu0 0.0
  %325 = vmatprep.subr.mxu0 0.0
  %326 = vmatpush1.msra.mxu0 0.0
  %327 = vmatprep.subr.mxu0 0.0
  %328 = vmatpush1.msra.mxu0 0.0
  %329 = vmatprep.subr.mxu0 0.0
  %330 = vmatpush1.msra.mxu0 0.0
  %331 = vmatprep.subr.mxu0 0.0
  %332 = vmatpush1.msra.mxu0 0.0
  %333 = vmatprep.subr.mxu0 0.0
  %334 = vmatpush1.msra.mxu0 0.0
  %335 = vmatprep.subr.mxu0 0.0
  %336 = vmatpush1.msra.mxu0 0.0
  %337 = vmatprep.subr.mxu0 0.0
  %338 = vmatpush1.msra.mxu0 0.0
  %339 = vmatprep.subr.mxu0 0.0
  %340 = vmatpush1.msra.mxu0 0.0
  %341 = vmatprep.subr.mxu0 0.0
  %342 = vmatpush1.msra.mxu0 0.0
  %343 = vmatprep.subr.mxu0 0.0
  %344 = vmatpush1.msra.mxu0 0.0
  %345 = vmatprep.subr.mxu0 0.0
  %346 = vmatpush1.msra.mxu0 0.0
  %347 = vmatprep.subr.mxu0 0.0
  %348 = vmatpush1.msra.mxu0 0.0
  %349 = vmatprep.subr.mxu0 0.0
  %350 = vmatpush1.msra.mxu0 0.0
  %351 = vmatprep.subr.mxu0 0.0
  %352 = vmatpush1.msra.mxu0 0.0
  %353 = vmatprep.subr.mxu0 0.0
  %354 = vmatpush1.msra.mxu0 0.0
  %355 = vmatprep.subr.mxu0 0.0
  %356 = vmatpush1.msra.mxu0 0.0
  %357 = vmatprep.subr.mxu0 0.0
  %358 = vmatpush1.msra.mxu0 0.0
  %359 = vmatprep.subr.mxu0 0.0
  %360 = vmatpush1.msra.mxu0 0.0
  %361 = vmatprep.subr.mxu0 0.0
  %362 = vmatpush1.msra.mxu0 0.0
  %363 = vmatprep.subr.mxu0 0.0
  %364 = vmatpush1.msra.mxu0 0.0
  %365 = vmatprep.subr.mxu0 0.0
  %366 = vmatpush1.msra.mxu0 0.0
  %367 = vmatprep.subr.mxu0 0.0
  %368 = vmatpush1.msra.mxu0 0.0
  %369 = vmatprep.subr.mxu0 0.0
  %370 = vmatpush1.msra.mxu0 0.0
  %371 = vmatprep.subr.mxu0 0.0
  %372 = vmatpush1.msra.mxu0 0.0
  %373 = vmatprep.subr.mxu0 0.0
  %374 = vmatpush1.msra.mxu0 0.0
  %375 = vmatprep.subr.mxu0 0.0
  %376 = vmatpush1.msra.mxu0 0.0
  %377 = vmatprep.mubr.f32.mxu0 0.0
  %v378 = vand.u32 %v57, 4294901760
  %v379 = vsub.f32 %v57, %v378
  %v380 = vand.u32 %v379, 4294901760
  %381 = vmatmul.mubr.f32.gmra.mrb[0].mxu0 %v380
  %v382 = vpop.f32.mrb[0].mxu0
  %v383 = vadd.f32 %v306, %v382
  %v384 = vpop.f32.mrb[0].mxu0
  %385 = vdwg.mxu0
  %386 = vmatprep.subr.mxu0 0.0
  %v387 = vand.u32 %v44, 4294901760
  %v388 = vsub.f32 %v44, %v387
  %v389 = vand.u32 %v388, 4294901760
  %390 = vmatpush1.msra.mxu0 %v389
  %391 = vmatprep.subr.mxu0 0.0
  %v392 = vand.u32 %v45, 4294901760
  %v393 = vsub.f32 %v45, %v392
  %v394 = vand.u32 %v393, 4294901760
  %395 = vmatpush1.msra.mxu0 %v394
  %396 = vmatprep.subr.mxu0 0.0
  %v397 = vand.u32 %v46, 4294901760
  %v398 = vsub.f32 %v46, %v397
  %v399 = vand.u32 %v398, 4294901760
  %400 = vmatpush1.msra.mxu0 %v399
  %401 = vmatprep.subr.mxu0 0.0
  %v402 = vand.u32 %v47, 4294901760
  %v403 = vsub.f32 %v47, %v402
  %v404 = vand.u32 %v403, 4294901760
  %405 = vmatpush1.msra.mxu0 %v404
  %406 = vmatprep.subr.mxu0 0.0
  %407 = vmatpush1.msra.mxu0 0.0
  %408 = vmatprep.subr.mxu0 0.0
  %409 = vmatpush1.msra.mxu0 0.0
  %410 = vmatprep.subr.mxu0 0.0
  %411 = vmatpush1.msra.mxu0 0.0
  %412 = vmatprep.subr.mxu0 0.0
  %413 = vmatpush1.msra.mxu0 0.0
  %414 = vmatprep.subr.mxu0 0.0
  %415 = vmatpush1.msra.mxu0 0.0
  %416 = vmatprep.subr.mxu0 0.0
  %417 = vmatpush1.msra.mxu0 0.0
  %418 = vmatprep.subr.mxu0 0.0
  %419 = vmatpush1.msra.mxu0 0.0
  %420 = vmatprep.subr.mxu0 0.0
  %421 = vmatpush1.msra.mxu0 0.0
  %422 = vmatprep.subr.mxu0 0.0
  %423 = vmatpush1.msra.mxu0 0.0
  %424 = vmatprep.subr.mxu0 0.0
  %425 = vmatpush1.msra.mxu0 0.0
  %426 = vmatprep.subr.mxu0 0.0
  %427 = vmatpush1.msra.mxu0 0.0
  %428 = vmatprep.subr.mxu0 0.0
  %429 = vmatpush1.msra.mxu0 0.0
  %430 = vmatprep.subr.mxu0 0.0
  %431 = vmatpush1.msra.mxu0 0.0
  %432 = vmatprep.subr.mxu0 0.0
  %433 = vmatpush1.msra.mxu0 0.0
  %434 = vmatprep.subr.mxu0 0.0
  %435 = vmatpush1.msra.mxu0 0.0
  %436 = vmatprep.subr.mxu0 0.0
  %437 = vmatpush1.msra.mxu0 0.0
  %438 = vmatprep.subr.mxu0 0.0
  %439 = vmatpush1.msra.mxu0 0.0
  %440 = vmatprep.subr.mxu0 0.0
  %441 = vmatpush1.msra.mxu0 0.0
  %442 = vmatprep.subr.mxu0 0.0
  %443 = vmatpush1.msra.mxu0 0.0
  %444 = vmatprep.subr.mxu0 0.0
  %445 = vmatpush1.msra.mxu0 0.0
  %446 = vmatprep.subr.mxu0 0.0
  %447 = vmatpush1.msra.mxu0 0.0
  %448 = vmatprep.subr.mxu0 0.0
  %449 = vmatpush1.msra.mxu0 0.0
  %450 = vmatprep.subr.mxu0 0.0
  %451 = vmatpush1.msra.mxu0 0.0
  %452 = vmatprep.subr.mxu0 0.0
  %453 = vmatpush1.msra.mxu0 0.0
  %454 = vmatprep.subr.mxu0 0.0
  %455 = vmatpush1.msra.mxu0 0.0
  %456 = vmatprep.subr.mxu0 0.0
  %457 = vmatpush1.msra.mxu0 0.0
  %458 = vmatprep.subr.mxu0 0.0
  %459 = vmatpush1.msra.mxu0 0.0
  %460 = vmatprep.subr.mxu0 0.0
  %461 = vmatpush1.msra.mxu0 0.0
  %462 = vmatprep.mubr.f32.mxu0 0.0
  %v463 = vand.u32 %v57, 4294901760
  %464 = vmatmul.mubr.f32.gmra.mrb[0].mxu0 %v463
  %v465 = vpop.f32.mrb[0].mxu0
  %v466 = vadd.f32 %v383, %v465
  %v467 = vpop.f32.mrb[0].mxu0
  %468 = vdwg.mxu0
  %469 = vmatprep.subr.mxu0 0.0
  %v470 = vand.u32 %v44, 4294901760
  %471 = vmatpush1.msra.mxu0 %v470
  %472 = vmatprep.subr.mxu0 0.0
  %v473 = vand.u32 %v45, 4294901760
  %474 = vmatpush1.msra.mxu0 %v473
  %475 = vmatprep.subr.mxu0 0.0
  %v476 = vand.u32 %v46, 4294901760
  %477 = vmatpush1.msra.mxu0 %v476
  %478 = vmatprep.subr.mxu0 0.0
  %v479 = vand.u32 %v47, 4294901760
  %480 = vmatpush1.msra.mxu0 %v479
  %481 = vmatprep.subr.mxu0 0.0
  %482 = vmatpush1.msra.mxu0 0.0
  %483 = vmatprep.subr.mxu0 0.0
  %484 = vmatpush1.msra.mxu0 0.0
  %485 = vmatprep.subr.mxu0 0.0
  %486 = vmatpush1.msra.mxu0 0.0
  %487 = vmatprep.subr.mxu0 0.0
  %488 = vmatpush1.msra.mxu0 0.0
  %489 = vmatprep.subr.mxu0 0.0
  %490 = vmatpush1.msra.mxu0 0.0
  %491 = vmatprep.subr.mxu0 0.0
  %492 = vmatpush1.msra.mxu0 0.0
  %493 = vmatprep.subr.mxu0 0.0
  %494 = vmatpush1.msra.mxu0 0.0
  %495 = vmatprep.subr.mxu0 0.0
  %496 = vmatpush1.msra.mxu0 0.0
  %497 = vmatprep.subr.mxu0 0.0
  %498 = vmatpush1.msra.mxu0 0.0
  %499 = vmatprep.subr.mxu0 0.0
  %500 = vmatpush1.msra.mxu0 0.0
  %501 = vmatprep.subr.mxu0 0.0
  %502 = vmatpush1.msra.mxu0 0.0
  %503 = vmatprep.subr.mxu0 0.0
  %504 = vmatpush1.msra.mxu0 0.0
  %505 = vmatprep.subr.mxu0 0.0
  %506 = vmatpush1.msra.mxu0 0.0
  %507 = vmatprep.subr.mxu0 0.0
  %508 = vmatpush1.msra.mxu0 0.0
  %509 = vmatprep.subr.mxu0 0.0
  %510 = vmatpush1.msra.mxu0 0.0
  %511 = vmatprep.subr.mxu0 0.0
  %512 = vmatpush1.msra.mxu0 0.0
  %513 = vmatprep.subr.mxu0 0.0
  %514 = vmatpush1.msra.mxu0 0.0
  %515 = vmatprep.subr.mxu0 0.0
  %516 = vmatpush1.msra.mxu0 0.0
  %517 = vmatprep.subr.mxu0 0.0
  %518 = vmatpush1.msra.mxu0 0.0
  %519 = vmatprep.subr.mxu0 0.0
  %520 = vmatpush1.msra.mxu0 0.0
  %521 = vmatprep.subr.mxu0 0.0
  %522 = vmatpush1.msra.mxu0 0.0
  %523 = vmatprep.subr.mxu0 0.0
  %524 = vmatpush1.msra.mxu0 0.0
  %525 = vmatprep.subr.mxu0 0.0
  %526 = vmatpush1.msra.mxu0 0.0
  %527 = vmatprep.subr.mxu0 0.0
  %528 = vmatpush1.msra.mxu0 0.0
  %529 = vmatprep.subr.mxu0 0.0
  %530 = vmatpush1.msra.mxu0 0.0
  %531 = vmatprep.subr.mxu0 0.0
  %532 = vmatpush1.msra.mxu0 0.0
  %533 = vmatprep.subr.mxu0 0.0
  %534 = vmatpush1.msra.mxu0 0.0
  %535 = vmatprep.subr.mxu0 0.0
  %536 = vmatpush1.msra.mxu0 0.0
  %537 = vmatprep.mubr.f32.mxu0 0.0
  %v538 = vand.u32 %v57, 4294901760
  %539 = vmatmul.mubr.f32.gmra.mrb[0].mxu0 %v538
  %v540 = vpop.f32.mrb[0].mxu0
  %v541 = vadd.f32 %v466, %v540
  %v542 = vpop.f32.mrb[0].mxu0
  %543 = vdwg.mxu0
  %v544 = vld [vmem:[%s1] sm:$0xff]
  %v545 = vld [vmem:[%s1 + $0x8] sm:$0xff]
  %v546 = vld [vmem:[%s1 + $0x10] sm:$0xff]
  %v547 = vld [vmem:[%s1 + $0x18] sm:$0xff]
  %v548 = vld [vmem:[%s1 + $0x20] sm:$0xff]
  %v549 = vld [vmem:[%s1 + $0x28] sm:$0xff]
  %v550 = vld [vmem:[%s1 + $0x30] sm:$0xff]
  %v551 = vld [vmem:[%s1 + $0x38] sm:$0xff]
  %v553 = vcombine.high %v541, %v541
  %v555 = vunpack.c.l.s4 1966171168
  %v556 = vunpack.c.0.s8 %v555
  %v557 = vlaneseq
  %v558 = vshrl.u32 %v557, 7
  %v559 = vsub.s32 %v556, %v558
  %v560 = vrot.slane %v541, %v559
  %v562 = vunpack.c.l.s4 1966171168
  %v563 = vunpack.c.0.s8 %v562
  %v564 = vlaneseq
  %v565 = vshrl.u32 %v564, 7
  %v566 = vsub.s32 %v563, %v565
  %v567 = vrot.slane %v553, %v566
  %v568 = vcombine.high %v560, %v560
  %v569 = vcombine.high %v567, %v567
  %v571 = vunpack.c.l.s4 1966171168
  %v572 = vunpack.c.0.s8 %v571
  %v573 = vlaneseq
  %v574 = vshrl.u32 %v573, 7
  %v575 = vsub.s32 %v572, %v574
  %v576 = vrot.slane %v560, %v575
  %v578 = vunpack.c.l.s4 1966171168
  %v579 = vunpack.c.0.s8 %v578
  %v580 = vlaneseq
  %v581 = vshrl.u32 %v580, 7
  %v582 = vsub.s32 %v579, %v581
  %v583 = vrot.slane %v567, %v582
  %v585 = vunpack.c.l.s4 1966171168
  %v586 = vunpack.c.0.s8 %v585
  %v587 = vlaneseq
  %v588 = vshrl.u32 %v587, 7
  %v589 = vsub.s32 %v586, %v588
  %v590 = vrot.slane %v568, %v589
  %v592 = vunpack.c.l.s4 1966171168
  %v593 = vunpack.c.0.s8 %v592
  %v594 = vlaneseq
  %v595 = vshrl.u32 %v594, 7
  %v596 = vsub.s32 %v593, %v595
  %v597 = vrot.slane %v569, %v596
  %v598 = vcombine.high %v576, %v576
  %v599 = vcombine.high %v583, %v583
  %v600 = vcombine.high %v590, %v590
  %v601 = vcombine.high %v597, %v597
  %v602 = vlaneseq
  %v603 = vshrl.u32 %v602, 7
  %v604 = vsub.s32 0, %v603
  %v605 = vrot.slane %v576, %v604
  %v606 = vlaneseq
  %v607 = vshrl.u32 %v606, 7
  %v608 = vsub.s32 0, %v607
  %v609 = vrot.slane %v590, %v608
  %v610 = vlaneseq
  %v611 = vshrl.u32 %v610, 7
  %v612 = vsub.s32 0, %v611
  %v613 = vrot.slane %v598, %v612
  %v614 = vlaneseq
  %v615 = vshrl.u32 %v614, 7
  %v616 = vsub.s32 0, %v615
  %v617 = vrot.slane %v600, %v616
  %v618 = vlaneseq
  %v619 = vshrl.u32 %v618, 7
  %v620 = vsub.s32 0, %v619
  %v621 = vrot.slane %v583, %v620
  %v622 = vlaneseq
  %v623 = vshrl.u32 %v622, 7
  %v624 = vsub.s32 0, %v623
  %v625 = vrot.slane %v597, %v624
  %v626 = vlaneseq
  %v627 = vshrl.u32 %v626, 7
  %v628 = vsub.s32 0, %v627
  %v629 = vrot.slane %v599, %v628
  %v630 = vlaneseq
  %v631 = vshrl.u32 %v630, 7
  %v632 = vsub.s32 0, %v631
  %v633 = vrot.slane %v601, %v632
  %v642 = vadd.f32 %v544, %v605
  %v643 = vadd.f32 %v545, %v609
  %v644 = vadd.f32 %v546, %v613
  %v645 = vadd.f32 %v547, %v617
  %v646 = vadd.f32 %v548, %v621
  %v647 = vadd.f32 %v549, %v625
  %v648 = vadd.f32 %v550, %v629
  %v649 = vadd.f32 %v551, %v633
  %v650 = vtanh.pop %v642
  %v651 = vtanh.pop %v643
  %v652 = vtanh.pop %v644
  %v653 = vtanh.pop %v645
  %v654 = vtanh.pop %v646
  %v655 = vtanh.pop %v647
  %v656 = vtanh.pop %v648
  %v657 = vtanh.pop %v649
  %v658 = vld [vmem:[%s6] sm:$0x1]
  %v660 = vlaneseq
  %v661 = vshrl.u32 %v660, 7
  %v662 = vsub.s32 0, %v661
  %v663 = vrot.slane %v658, %v662
  %v665 = vmul.f32 %v650, %v663
  %v666 = vmul.f32 %v651, %v663
  %v667 = vmul.f32 %v652, %v663
  %v668 = vmul.f32 %v653, %v663
  %v669 = vmul.f32 %v654, %v663
  %v670 = vmul.f32 %v655, %v663
  %v671 = vmul.f32 %v656, %v663
  %v672 = vmul.f32 %v657, %v663
  %v673 = vsel %vm55, %v665, 0.0
  %674 = vadd.xlane.f32.xlu0 %v673
  %v675 = vpop.xlane.xlu0 %674
  %v676 = vsel %vm55, %v666, 0.0
  %677 = vadd.xlane.f32.xlu0 %v676
  %v678 = vpop.xlane.xlu0 %677
  %v679 = vsel %vm55, %v667, 0.0
  %680 = vadd.xlane.f32.xlu0 %v679
  %v681 = vpop.xlane.xlu0 %680
  %v682 = vsel %vm55, %v668, 0.0
  %683 = vadd.xlane.f32.xlu0 %v682
  %v684 = vpop.xlane.xlu0 %683
  %v685 = vsel %vm55, %v669, 0.0
  %686 = vadd.xlane.f32.xlu0 %v685
  %v687 = vpop.xlane.xlu0 %686
  %v688 = vsel %vm55, %v670, 0.0
  %689 = vadd.xlane.f32.xlu0 %v688
  %v690 = vpop.xlane.xlu0 %689
  %v691 = vsel %vm55, %v671, 0.0
  %692 = vadd.xlane.f32.xlu0 %v691
  %v693 = vpop.xlane.xlu0 %692
  %v694 = vsel %vm55, %v672, 0.0
  %695 = vadd.xlane.f32.xlu0 %v694
  %v696 = vpop.xlane.xlu0 %695
  %v705 = vlaneseq
  %v706 = vand.u32 %v705, 127
  %v707 = vlaneseq
  %v708 = vshrl.u32 %v707, 7
  %v709 = vsub.s32 %v706, %v708
  %v710 = vrot.slane %v675, %v709
  %v711 = vlaneseq
  %v712 = vshrl.u32 %v711, 7
  %v713 = vsub.s32 %v706, %v712
  %v714 = vrot.slane %v678, %v713
  %v715 = vlaneseq
  %v716 = vshrl.u32 %v715, 7
  %v717 = vsub.s32 %v706, %v716
  %v718 = vrot.slane %v681, %v717
  %v719 = vlaneseq
  %v720 = vshrl.u32 %v719, 7
  %v721 = vsub.s32 %v706, %v720
  %v722 = vrot.slane %v684, %v721
  %v723 = vlaneseq
  %v724 = vshrl.u32 %v723, 7
  %v725 = vsub.s32 %v706, %v724
  %v726 = vrot.slane %v687, %v725
  %v727 = vlaneseq
  %v728 = vshrl.u32 %v727, 7
  %v729 = vsub.s32 %v706, %v728
  %v730 = vrot.slane %v690, %v729
  %v731 = vlaneseq
  %v732 = vshrl.u32 %v731, 7
  %v733 = vsub.s32 %v706, %v732
  %v734 = vrot.slane %v693, %v733
  %v735 = vlaneseq
  %v736 = vshrl.u32 %v735, 7
  %v737 = vsub.s32 %v706, %v736
  %v738 = vrot.slane %v696, %v737
  %vm739 = vcmask 1041409
  %v740 = vsel %vm739, %v714, %v710
  %vm741 = vcmask 1042434
  %v742 = vsel %vm741, %v718, %v740
  %vm743 = vcmask 1043459
  %v744 = vsel %vm743, %v722, %v742
  %vm745 = vcmask 1044484
  %v746 = vsel %vm745, %v726, %v744
  %vm747 = vcmask 1045509
  %v748 = vsel %vm747, %v730, %v746
  %vm749 = vcmask 1046534
  %v750 = vsel %vm749, %v734, %v748
  %vm751 = vcmask 1047559
  %v752 = vsel %vm751, %v738, %v750
  %vm754 = vcmask 64512
  %v755 = vsel %vm754, %v752, -inf
  %756 = vmax.xlane.f32.xlu0 %v755
  %v757 = vpop.xlane.xlu0 %756
  %v759 = vlaneseq
  %v760 = vshrl.u32 %v759, 7
  %v761 = vsub.s32 0, %v760
  %v762 = vrot.slane %v757, %v761
  %v763 = vlaneseq
  %v764 = vshrl.u32 %v763, 7
  %v765 = vsub.s32 1, %v764
  %v766 = vrot.slane %v757, %v765
  %v767 = vlaneseq
  %v768 = vshrl.u32 %v767, 7
  %v769 = vsub.s32 2, %v768
  %v770 = vrot.slane %v757, %v769
  %v771 = vlaneseq
  %v772 = vshrl.u32 %v771, 7
  %v773 = vsub.s32 3, %v772
  %v774 = vrot.slane %v757, %v773
  %v775 = vlaneseq
  %v776 = vshrl.u32 %v775, 7
  %v777 = vsub.s32 4, %v776
  %v778 = vrot.slane %v757, %v777
  %v779 = vlaneseq
  %v780 = vshrl.u32 %v779, 7
  %v781 = vsub.s32 5, %v780
  %v782 = vrot.slane %v757, %v781
  %v783 = vlaneseq
  %v784 = vshrl.u32 %v783, 7
  %v785 = vsub.s32 6, %v784
  %v786 = vrot.slane %v757, %v785
  %v787 = vlaneseq
  %v788 = vshrl.u32 %v787, 7
  %v789 = vsub.s32 7, %v788
  %v790 = vrot.slane %v757, %v789
  %v799 = vsub.f32 %v675, %v762
  %v800 = vsub.f32 %v678, %v766
  %v801 = vsub.f32 %v681, %v770
  %v802 = vsub.f32 %v684, %v774
  %v803 = vsub.f32 %v687, %v778
  %v804 = vsub.f32 %v690, %v782
  %v805 = vsub.f32 %v693, %v786
  %v806 = vsub.f32 %v696, %v790
  %v807 = vmul.f32 %v799, 1.442695
  %v808 = vpow.pop %v807
  %v809 = vmul.f32 %v800, 1.442695
  %v810 = vpow.pop %v809
  %v811 = vmul.f32 %v801, 1.442695
  %v812 = vpow.pop %v811
  %v813 = vmul.f32 %v802, 1.442695
  %v814 = vpow.pop %v813
  %v815 = vmul.f32 %v803, 1.442695
  %v816 = vpow.pop %v815
  %v817 = vmul.f32 %v804, 1.442695
  %v818 = vpow.pop %v817
  %v819 = vmul.f32 %v805, 1.442695
  %v820 = vpow.pop %v819
  %v821 = vmul.f32 %v806, 1.442695
  %v822 = vpow.pop %v821
  %831 = vset.pattern.permute.xlu0 0
  %832 = vperm.xlu0 %831, %v808
  %v833 = vpop.permute.xlu0 %832
  %834 = vset.pattern.permute.xlu0 0
  %835 = vperm.xlu0 %834, %v810
  %v836 = vpop.permute.xlu0 %835
  %837 = vset.pattern.permute.xlu0 0
  %838 = vperm.xlu0 %837, %v812
  %v839 = vpop.permute.xlu0 %838
  %840 = vset.pattern.permute.xlu0 0
  %841 = vperm.xlu0 %840, %v814
  %v842 = vpop.permute.xlu0 %841
  %843 = vset.pattern.permute.xlu0 0
  %844 = vperm.xlu0 %843, %v816
  %v845 = vpop.permute.xlu0 %844
  %846 = vset.pattern.permute.xlu0 0
  %847 = vperm.xlu0 %846, %v818
  %v848 = vpop.permute.xlu0 %847
  %849 = vset.pattern.permute.xlu0 0
  %850 = vperm.xlu0 %849, %v820
  %v851 = vpop.permute.xlu0 %850
  %852 = vset.pattern.permute.xlu0 0
  %853 = vperm.xlu0 %852, %v822
  %v854 = vpop.permute.xlu0 %853
  %v855 = vlaneseq
  %v856 = vshrl.u32 %v855, 7
  %v857 = vsub.s32 %v706, %v856
  %v858 = vrot.slane %v833, %v857
  %v859 = vlaneseq
  %v860 = vshrl.u32 %v859, 7
  %v861 = vsub.s32 %v706, %v860
  %v862 = vrot.slane %v836, %v861
  %v863 = vlaneseq
  %v864 = vshrl.u32 %v863, 7
  %v865 = vsub.s32 %v706, %v864
  %v866 = vrot.slane %v839, %v865
  %v867 = vlaneseq
  %v868 = vshrl.u32 %v867, 7
  %v869 = vsub.s32 %v706, %v868
  %v870 = vrot.slane %v842, %v869
  %v871 = vlaneseq
  %v872 = vshrl.u32 %v871, 7
  %v873 = vsub.s32 %v706, %v872
  %v874 = vrot.slane %v845, %v873
  %v875 = vlaneseq
  %v876 = vshrl.u32 %v875, 7
  %v877 = vsub.s32 %v706, %v876
  %v878 = vrot.slane %v848, %v877
  %v879 = vlaneseq
  %v880 = vshrl.u32 %v879, 7
  %v881 = vsub.s32 %v706, %v880
  %v882 = vrot.slane %v851, %v881
  %v883 = vlaneseq
  %v884 = vshrl.u32 %v883, 7
  %v885 = vsub.s32 %v706, %v884
  %v886 = vrot.slane %v854, %v885
  %v887 = vsel %vm739, %v862, %v858
  %v888 = vsel %vm741, %v866, %v887
  %v889 = vsel %vm743, %v870, %v888
  %v890 = vsel %vm745, %v874, %v889
  %v891 = vsel %vm747, %v878, %v890
  %v892 = vsel %vm749, %v882, %v891
  %v893 = vsel %vm751, %v886, %v892
  %v895 = vsel %vm754, %v893, 0.0
  %896 = vadd.xlane.f32.xlu0 %v895
  %v897 = vpop.xlane.xlu0 %896
  %v899 = vlaneseq
  %v900 = vshrl.u32 %v899, 7
  %v901 = vsub.s32 0, %v900
  %v902 = vrot.slane %v897, %v901
  %v903 = vlaneseq
  %v904 = vshrl.u32 %v903, 7
  %v905 = vsub.s32 1, %v904
  %v906 = vrot.slane %v897, %v905
  %v907 = vlaneseq
  %v908 = vshrl.u32 %v907, 7
  %v909 = vsub.s32 2, %v908
  %v910 = vrot.slane %v897, %v909
  %v911 = vlaneseq
  %v912 = vshrl.u32 %v911, 7
  %v913 = vsub.s32 3, %v912
  %v914 = vrot.slane %v897, %v913
  %v915 = vlaneseq
  %v916 = vshrl.u32 %v915, 7
  %v917 = vsub.s32 4, %v916
  %v918 = vrot.slane %v897, %v917
  %v919 = vlaneseq
  %v920 = vshrl.u32 %v919, 7
  %v921 = vsub.s32 5, %v920
  %v922 = vrot.slane %v897, %v921
  %v923 = vlaneseq
  %v924 = vshrl.u32 %v923, 7
  %v925 = vsub.s32 6, %v924
  %v926 = vrot.slane %v897, %v925
  %v927 = vlaneseq
  %v928 = vshrl.u32 %v927, 7
  %v929 = vsub.s32 7, %v928
  %v930 = vrot.slane %v897, %v929
  %v939 = vrcp.pop %v902
  %v940 = vmul.f32 %v808, %v939
  %v941 = vrcp.pop %v906
  %v942 = vmul.f32 %v810, %v941
  %v943 = vrcp.pop %v910
  %v944 = vmul.f32 %v812, %v943
  %v945 = vrcp.pop %v914
  %v946 = vmul.f32 %v814, %v945
  %v947 = vrcp.pop %v918
  %v948 = vmul.f32 %v816, %v947
  %v949 = vrcp.pop %v922
  %v950 = vmul.f32 %v818, %v949
  %v951 = vrcp.pop %v926
  %v952 = vmul.f32 %v820, %v951
  %v953 = vrcp.pop %v930
  %v954 = vmul.f32 %v822, %v953
  %963 = vset.pattern.permute.xlu0 0
  %964 = vperm.xlu0 %963, %v940
  %v965 = vpop.permute.xlu0 %964
  %966 = vset.pattern.permute.xlu0 0
  %967 = vperm.xlu0 %966, %v942
  %v968 = vpop.permute.xlu0 %967
  %969 = vset.pattern.permute.xlu0 0
  %970 = vperm.xlu0 %969, %v944
  %v971 = vpop.permute.xlu0 %970
  %972 = vset.pattern.permute.xlu0 0
  %973 = vperm.xlu0 %972, %v946
  %v974 = vpop.permute.xlu0 %973
  %975 = vset.pattern.permute.xlu0 0
  %976 = vperm.xlu0 %975, %v948
  %v977 = vpop.permute.xlu0 %976
  %978 = vset.pattern.permute.xlu0 0
  %979 = vperm.xlu0 %978, %v950
  %v980 = vpop.permute.xlu0 %979
  %981 = vset.pattern.permute.xlu0 0
  %982 = vperm.xlu0 %981, %v952
  %v983 = vpop.permute.xlu0 %982
  %984 = vset.pattern.permute.xlu0 0
  %985 = vperm.xlu0 %984, %v954
  %v986 = vpop.permute.xlu0 %985
  %v987 = vlaneseq
  %v988 = vshrl.u32 %v987, 7
  %v989 = vsub.s32 %v706, %v988
  %v990 = vrot.slane %v965, %v989
  %v991 = vlaneseq
  %v992 = vshrl.u32 %v991, 7
  %v993 = vsub.s32 %v706, %v992
  %v994 = vrot.slane %v968, %v993
  %v995 = vlaneseq
  %v996 = vshrl.u32 %v995, 7
  %v997 = vsub.s32 %v706, %v996
  %v998 = vrot.slane %v971, %v997
  %v999 = vlaneseq
  %v1000 = vshrl.u32 %v999, 7
  %v1001 = vsub.s32 %v706, %v1000
  %v1002 = vrot.slane %v974, %v1001
  %v1003 = vlaneseq
  %v1004 = vshrl.u32 %v1003, 7
  %v1005 = vsub.s32 %v706, %v1004
  %v1006 = vrot.slane %v977, %v1005
  %v1007 = vlaneseq
  %v1008 = vshrl.u32 %v1007, 7
  %v1009 = vsub.s32 %v706, %v1008
  %v1010 = vrot.slane %v980, %v1009
  %v1011 = vlaneseq
  %v1012 = vshrl.u32 %v1011, 7
  %v1013 = vsub.s32 %v706, %v1012
  %v1014 = vrot.slane %v983, %v1013
  %v1015 = vlaneseq
  %v1016 = vshrl.u32 %v1015, 7
  %v1017 = vsub.s32 %v706, %v1016
  %v1018 = vrot.slane %v986, %v1017
  %v1019 = vsel %vm739, %v994, %v990
  %v1020 = vsel %vm741, %v998, %v1019
  %v1021 = vsel %vm743, %v1002, %v1020
  %v1022 = vsel %vm745, %v1006, %v1021
  %v1023 = vsel %vm747, %v1010, %v1022
  %v1024 = vsel %vm749, %v1014, %v1023
  %v1025 = vsel %vm751, %v1018, %v1024
  %1027 = vst.msk [vmem:[%s13] sm:$0xff] %vm754, %v1025
  %v1028 = vld [vmem:[%s0] sm:$0xff]
  %v1029 = vld [vmem:[%s0 + $0x8] sm:$0xff]
  %v1030 = vld [vmem:[%s0 + $0x10] sm:$0xff]
  %v1031 = vld [vmem:[%s0 + $0x18] sm:$0xff]
  %v1032 = vld [vmem:[%s0 + $0x20] sm:$0xff]
  %v1033 = vld [vmem:[%s0 + $0x28] sm:$0xff]
  %v1034 = vld [vmem:[%s0 + $0x30] sm:$0xff]
  %v1035 = vld [vmem:[%s0 + $0x38] sm:$0xff]
  %v1044 = vmul.f32 %v1028, %v965
  %v1045 = vmul.f32 %v1029, %v968
  %v1046 = vmul.f32 %v1030, %v971
  %v1047 = vmul.f32 %v1031, %v974
  %v1048 = vmul.f32 %v1032, %v977
  %v1049 = vmul.f32 %v1033, %v980
  %v1050 = vmul.f32 %v1034, %v983
  %v1051 = vmul.f32 %v1035, %v986
  %vm1052 = vcmask 130048
  %v1053 = vsel %vm1052, %v1044, 0.0
  %v1054 = vrot.slane %v1053, 4
  %v1055 = vadd.f32 %v1053, %v1054
  %v1056 = vrot.slane %v1055, 2
  %v1057 = vadd.f32 %v1055, %v1056
  %v1058 = vrot.slane %v1057, 1
  %v1059 = vadd.f32 %v1057, %v1058
  %v1060 = vsel %vm1052, %v1045, 0.0
  %v1061 = vrot.slane %v1060, 4
  %v1062 = vadd.f32 %v1060, %v1061
  %v1063 = vrot.slane %v1062, 2
  %v1064 = vadd.f32 %v1062, %v1063
  %v1065 = vrot.slane %v1064, 1
  %v1066 = vadd.f32 %v1064, %v1065
  %v1067 = vsel %vm1052, %v1046, 0.0
  %v1068 = vrot.slane %v1067, 4
  %v1069 = vadd.f32 %v1067, %v1068
  %v1070 = vrot.slane %v1069, 2
  %v1071 = vadd.f32 %v1069, %v1070
  %v1072 = vrot.slane %v1071, 1
  %v1073 = vadd.f32 %v1071, %v1072
  %v1074 = vsel %vm1052, %v1047, 0.0
  %v1075 = vrot.slane %v1074, 4
  %v1076 = vadd.f32 %v1074, %v1075
  %v1077 = vrot.slane %v1076, 2
  %v1078 = vadd.f32 %v1076, %v1077
  %v1079 = vrot.slane %v1078, 1
  %v1080 = vadd.f32 %v1078, %v1079
  %v1081 = vsel %vm1052, %v1048, 0.0
  %v1082 = vrot.slane %v1081, 4
  %v1083 = vadd.f32 %v1081, %v1082
  %v1084 = vrot.slane %v1083, 2
  %v1085 = vadd.f32 %v1083, %v1084
  %v1086 = vrot.slane %v1085, 1
  %v1087 = vadd.f32 %v1085, %v1086
  %v1088 = vsel %vm1052, %v1049, 0.0
  %v1089 = vrot.slane %v1088, 4
  %v1090 = vadd.f32 %v1088, %v1089
  %v1091 = vrot.slane %v1090, 2
  %v1092 = vadd.f32 %v1090, %v1091
  %v1093 = vrot.slane %v1092, 1
  %v1094 = vadd.f32 %v1092, %v1093
  %v1095 = vsel %vm1052, %v1050, 0.0
  %v1096 = vrot.slane %v1095, 4
  %v1097 = vadd.f32 %v1095, %v1096
  %v1098 = vrot.slane %v1097, 2
  %v1099 = vadd.f32 %v1097, %v1098
  %v1100 = vrot.slane %v1099, 1
  %v1101 = vadd.f32 %v1099, %v1100
  %v1102 = vsel %vm1052, %v1051, 0.0
  %v1103 = vrot.slane %v1102, 4
  %v1104 = vadd.f32 %v1102, %v1103
  %v1105 = vrot.slane %v1104, 2
  %v1106 = vadd.f32 %v1104, %v1105
  %v1107 = vrot.slane %v1106, 1
  %v1108 = vadd.f32 %v1106, %v1107
  %v1109 = vld [vmem:[%s7] sm:$0xff]
  %v1110 = vld [vmem:[%s7 + $0x8] sm:$0xff]
  %v1111 = vld [vmem:[%s3] sm:$0xff]
  %v1112 = vld [vmem:[%s8] sm:$0xff]
  %v1113 = vld [vmem:[%s8 + $0x8] sm:$0xff]
  %v1114 = vld [vmem:[%s8 + $0x10] sm:$0xff]
  %v1115 = vld [vmem:[%s8 + $0x18] sm:$0xff]
  %v1117 = vsel %vm55, %v1111, 0
  %1119 = vmatprep.subr.mxu0 0.0
  %v1120 = vand.u32 %v1112, 4294901760
  %1121 = vmatpush1.msra.mxu0 %v1120
  %1122 = vmatprep.subr.mxu0 0.0
  %v1123 = vand.u32 %v1113, 4294901760
  %1124 = vmatpush1.msra.mxu0 %v1123
  %1125 = vmatprep.subr.mxu0 0.0
  %v1126 = vand.u32 %v1114, 4294901760
  %1127 = vmatpush1.msra.mxu0 %v1126
  %1128 = vmatprep.subr.mxu0 0.0
  %v1129 = vand.u32 %v1115, 4294901760
  %1130 = vmatpush1.msra.mxu0 %v1129
  %1131 = vmatprep.subr.mxu0 0.0
  %1132 = vmatpush1.msra.mxu0 0.0
  %1133 = vmatprep.subr.mxu0 0.0
  %1134 = vmatpush1.msra.mxu0 0.0
  %1135 = vmatprep.subr.mxu0 0.0
  %1136 = vmatpush1.msra.mxu0 0.0
  %1137 = vmatprep.subr.mxu0 0.0
  %1138 = vmatpush1.msra.mxu0 0.0
  %1139 = vmatprep.subr.mxu0 0.0
  %1140 = vmatpush1.msra.mxu0 0.0
  %1141 = vmatprep.subr.mxu0 0.0
  %1142 = vmatpush1.msra.mxu0 0.0
  %1143 = vmatprep.subr.mxu0 0.0
  %1144 = vmatpush1.msra.mxu0 0.0
  %1145 = vmatprep.subr.mxu0 0.0
  %1146 = vmatpush1.msra.mxu0 0.0
  %1147 = vmatprep.subr.mxu0 0.0
  %1148 = vmatpush1.msra.mxu0 0.0
  %1149 = vmatprep.subr.mxu0 0.0
  %1150 = vmatpush1.msra.mxu0 0.0
  %1151 = vmatprep.subr.mxu0 0.0
  %1152 = vmatpush1.msra.mxu0 0.0
  %1153 = vmatprep.subr.mxu0 0.0
  %1154 = vmatpush1.msra.mxu0 0.0
  %1155 = vmatprep.subr.mxu0 0.0
  %1156 = vmatpush1.msra.mxu0 0.0
  %1157 = vmatprep.subr.mxu0 0.0
  %1158 = vmatpush1.msra.mxu0 0.0
  %1159 = vmatprep.subr.mxu0 0.0
  %1160 = vmatpush1.msra.mxu0 0.0
  %1161 = vmatprep.subr.mxu0 0.0
  %1162 = vmatpush1.msra.mxu0 0.0
  %1163 = vmatprep.subr.mxu0 0.0
  %1164 = vmatpush1.msra.mxu0 0.0
  %1165 = vmatprep.subr.mxu0 0.0
  %1166 = vmatpush1.msra.mxu0 0.0
  %1167 = vmatprep.subr.mxu0 0.0
  %1168 = vmatpush1.msra.mxu0 0.0
  %1169 = vmatprep.subr.mxu0 0.0
  %1170 = vmatpush1.msra.mxu0 0.0
  %1171 = vmatprep.subr.mxu0 0.0
  %1172 = vmatpush1.msra.mxu0 0.0
  %1173 = vmatprep.subr.mxu0 0.0
  %1174 = vmatpush1.msra.mxu0 0.0
  %1175 = vmatprep.subr.mxu0 0.0
  %1176 = vmatpush1.msra.mxu0 0.0
  %1177 = vmatprep.subr.mxu0 0.0
  %1178 = vmatpush1.msra.mxu0 0.0
  %1179 = vmatprep.subr.mxu0 0.0
  %1180 = vmatpush1.msra.mxu0 0.0
  %1181 = vmatprep.subr.mxu0 0.0
  %1182 = vmatpush1.msra.mxu0 0.0
  %1183 = vmatprep.subr.mxu0 0.0
  %1184 = vmatpush1.msra.mxu0 0.0
  %1185 = vmatprep.subr.mxu0 0.0
  %1186 = vmatpush1.msra.mxu0 0.0
  %1187 = vmatprep.mubr.f32.mxu0 0.0
  %v1188 = vand.u32 %v1117, 4294901760
  %v1189 = vsub.f32 %v1117, %v1188
  %v1190 = vand.u32 %v1189, 4294901760
  %v1191 = vsub.f32 %v1189, %v1190
  %v1192 = vand.u32 %v1191, 4294901760
  %1193 = vmatmul.mubr.f32.gmra.mrb[0].mxu0 %v1192
  %v1194 = vpop.f32.mrb[0].mxu0
  %v1195 = vadd.f32 0.0, %v1194
  %v1196 = vpop.f32.mrb[0].mxu0
  %1197 = vdwg.mxu0
  %1198 = vmatprep.subr.mxu0 0.0
  %v1199 = vand.u32 %v1112, 4294901760
  %v1200 = vsub.f32 %v1112, %v1199
  %v1201 = vand.u32 %v1200, 4294901760
  %v1202 = vsub.f32 %v1200, %v1201
  %v1203 = vand.u32 %v1202, 4294901760
  %1204 = vmatpush1.msra.mxu0 %v1203
  %1205 = vmatprep.subr.mxu0 0.0
  %v1206 = vand.u32 %v1113, 4294901760
  %v1207 = vsub.f32 %v1113, %v1206
  %v1208 = vand.u32 %v1207, 4294901760
  %v1209 = vsub.f32 %v1207, %v1208
  %v1210 = vand.u32 %v1209, 4294901760
  %1211 = vmatpush1.msra.mxu0 %v1210
  %1212 = vmatprep.subr.mxu0 0.0
  %v1213 = vand.u32 %v1114, 4294901760
  %v1214 = vsub.f32 %v1114, %v1213
  %v1215 = vand.u32 %v1214, 4294901760
  %v1216 = vsub.f32 %v1214, %v1215
  %v1217 = vand.u32 %v1216, 4294901760
  %1218 = vmatpush1.msra.mxu0 %v1217
  %1219 = vmatprep.subr.mxu0 0.0
  %v1220 = vand.u32 %v1115, 4294901760
  %v1221 = vsub.f32 %v1115, %v1220
  %v1222 = vand.u32 %v1221, 4294901760
  %v1223 = vsub.f32 %v1221, %v1222
  %v1224 = vand.u32 %v1223, 4294901760
  %1225 = vmatpush1.msra.mxu0 %v1224
  %1226 = vmatprep.subr.mxu0 0.0
  %1227 = vmatpush1.msra.mxu0 0.0
  %1228 = vmatprep.subr.mxu0 0.0
  %1229 = vmatpush1.msra.mxu0 0.0
  %1230 = vmatprep.subr.mxu0 0.0
  %1231 = vmatpush1.msra.mxu0 0.0
  %1232 = vmatprep.subr.mxu0 0.0
  %1233 = vmatpush1.msra.mxu0 0.0
  %1234 = vmatprep.subr.mxu0 0.0
  %1235 = vmatpush1.msra.mxu0 0.0
  %1236 = vmatprep.subr.mxu0 0.0
  %1237 = vmatpush1.msra.mxu0 0.0
  %1238 = vmatprep.subr.mxu0 0.0
  %1239 = vmatpush1.msra.mxu0 0.0
  %1240 = vmatprep.subr.mxu0 0.0
  %1241 = vmatpush1.msra.mxu0 0.0
  %1242 = vmatprep.subr.mxu0 0.0
  %1243 = vmatpush1.msra.mxu0 0.0
  %1244 = vmatprep.subr.mxu0 0.0
  %1245 = vmatpush1.msra.mxu0 0.0
  %1246 = vmatprep.subr.mxu0 0.0
  %1247 = vmatpush1.msra.mxu0 0.0
  %1248 = vmatprep.subr.mxu0 0.0
  %1249 = vmatpush1.msra.mxu0 0.0
  %1250 = vmatprep.subr.mxu0 0.0
  %1251 = vmatpush1.msra.mxu0 0.0
  %1252 = vmatprep.subr.mxu0 0.0
  %1253 = vmatpush1.msra.mxu0 0.0
  %1254 = vmatprep.subr.mxu0 0.0
  %1255 = vmatpush1.msra.mxu0 0.0
  %1256 = vmatprep.subr.mxu0 0.0
  %1257 = vmatpush1.msra.mxu0 0.0
  %1258 = vmatprep.subr.mxu0 0.0
  %1259 = vmatpush1.msra.mxu0 0.0
  %1260 = vmatprep.subr.mxu0 0.0
  %1261 = vmatpush1.msra.mxu0 0.0
  %1262 = vmatprep.subr.mxu0 0.0
  %1263 = vmatpush1.msra.mxu0 0.0
  %1264 = vmatprep.subr.mxu0 0.0
  %1265 = vmatpush1.msra.mxu0 0.0
  %1266 = vmatprep.subr.mxu0 0.0
  %1267 = vmatpush1.msra.mxu0 0.0
  %1268 = vmatprep.subr.mxu0 0.0
  %1269 = vmatpush1.msra.mxu0 0.0
  %1270 = vmatprep.subr.mxu0 0.0
  %1271 = vmatpush1.msra.mxu0 0.0
  %1272 = vmatprep.subr.mxu0 0.0
  %1273 = vmatpush1.msra.mxu0 0.0
  %1274 = vmatprep.subr.mxu0 0.0
  %1275 = vmatpush1.msra.mxu0 0.0
  %1276 = vmatprep.subr.mxu0 0.0
  %1277 = vmatpush1.msra.mxu0 0.0
  %1278 = vmatprep.subr.mxu0 0.0
  %1279 = vmatpush1.msra.mxu0 0.0
  %1280 = vmatprep.subr.mxu0 0.0
  %1281 = vmatpush1.msra.mxu0 0.0
  %1282 = vmatprep.mubr.f32.mxu0 0.0
  %v1283 = vand.u32 %v1117, 4294901760
  %1284 = vmatmul.mubr.f32.gmra.mrb[0].mxu0 %v1283
  %v1285 = vpop.f32.mrb[0].mxu0
  %v1286 = vadd.f32 %v1195, %v1285
  %v1287 = vpop.f32.mrb[0].mxu0
  %1288 = vdwg.mxu0
  %1289 = vmatprep.subr.mxu0 0.0
  %v1290 = vand.u32 %v1112, 4294901760
  %v1291 = vsub.f32 %v1112, %v1290
  %1292 = vmatpush1.msra.mxu0 %v1291
  %1293 = vmatprep.subr.mxu0 0.0
  %v1294 = vand.u32 %v1113, 4294901760
  %v1295 = vsub.f32 %v1113, %v1294
  %1296 = vmatpush1.msra.mxu0 %v1295
  %1297 = vmatprep.subr.mxu0 0.0
  %v1298 = vand.u32 %v1114, 4294901760
  %v1299 = vsub.f32 %v1114, %v1298
  %1300 = vmatpush1.msra.mxu0 %v1299
  %1301 = vmatprep.subr.mxu0 0.0
  %v1302 = vand.u32 %v1115, 4294901760
  %v1303 = vsub.f32 %v1115, %v1302
  %1304 = vmatpush1.msra.mxu0 %v1303
  %1305 = vmatprep.subr.mxu0 0.0
  %1306 = vmatpush1.msra.mxu0 0.0
  %1307 = vmatprep.subr.mxu0 0.0
  %1308 = vmatpush1.msra.mxu0 0.0
  %1309 = vmatprep.subr.mxu0 0.0
  %1310 = vmatpush1.msra.mxu0 0.0
  %1311 = vmatprep.subr.mxu0 0.0
  %1312 = vmatpush1.msra.mxu0 0.0
  %1313 = vmatprep.subr.mxu0 0.0
  %1314 = vmatpush1.msra.mxu0 0.0
  %1315 = vmatprep.subr.mxu0 0.0
  %1316 = vmatpush1.msra.mxu0 0.0
  %1317 = vmatprep.subr.mxu0 0.0
  %1318 = vmatpush1.msra.mxu0 0.0
  %1319 = vmatprep.subr.mxu0 0.0
  %1320 = vmatpush1.msra.mxu0 0.0
  %1321 = vmatprep.subr.mxu0 0.0
  %1322 = vmatpush1.msra.mxu0 0.0
  %1323 = vmatprep.subr.mxu0 0.0
  %1324 = vmatpush1.msra.mxu0 0.0
  %1325 = vmatprep.subr.mxu0 0.0
  %1326 = vmatpush1.msra.mxu0 0.0
  %1327 = vmatprep.subr.mxu0 0.0
  %1328 = vmatpush1.msra.mxu0 0.0
  %1329 = vmatprep.subr.mxu0 0.0
  %1330 = vmatpush1.msra.mxu0 0.0
  %1331 = vmatprep.subr.mxu0 0.0
  %1332 = vmatpush1.msra.mxu0 0.0
  %1333 = vmatprep.subr.mxu0 0.0
  %1334 = vmatpush1.msra.mxu0 0.0
  %1335 = vmatprep.subr.mxu0 0.0
  %1336 = vmatpush1.msra.mxu0 0.0
  %1337 = vmatprep.subr.mxu0 0.0
  %1338 = vmatpush1.msra.mxu0 0.0
  %1339 = vmatprep.subr.mxu0 0.0
  %1340 = vmatpush1.msra.mxu0 0.0
  %1341 = vmatprep.subr.mxu0 0.0
  %1342 = vmatpush1.msra.mxu0 0.0
  %1343 = vmatprep.subr.mxu0 0.0
  %1344 = vmatpush1.msra.mxu0 0.0
  %1345 = vmatprep.subr.mxu0 0.0
  %1346 = vmatpush1.msra.mxu0 0.0
  %1347 = vmatprep.subr.mxu0 0.0
  %1348 = vmatpush1.msra.mxu0 0.0
  %1349 = vmatprep.subr.mxu0 0.0
  %1350 = vmatpush1.msra.mxu0 0.0
  %1351 = vmatprep.subr.mxu0 0.0
  %1352 = vmatpush1.msra.mxu0 0.0
  %1353 = vmatprep.subr.mxu0 0.0
  %1354 = vmatpush1.msra.mxu0 0.0
  %1355 = vmatprep.subr.mxu0 0.0
  %1356 = vmatpush1.msra.mxu0 0.0
  %1357 = vmatprep.subr.mxu0 0.0
  %1358 = vmatpush1.msra.mxu0 0.0
  %1359 = vmatprep.subr.mxu0 0.0
  %1360 = vmatpush1.msra.mxu0 0.0
  %1361 = vmatprep.mubr.f32.mxu0 0.0
  %v1362 = vand.u32 %v1117, 4294901760
  %v1363 = vsub.f32 %v1117, %v1362
  %1364 = vmatmul.mubr.f32.gmra.mrb[0].mxu0 %v1363
  %v1365 = vpop.f32.mrb[0].mxu0
  %v1366 = vadd.f32 %v1286, %v1365
  %v1367 = vpop.f32.mrb[0].mxu0
  %1368 = vdwg.mxu0
  %1369 = vmatprep.subr.mxu0 0.0
  %v1370 = vand.u32 %v1112, 4294901760
  %1371 = vmatpush1.msra.mxu0 %v1370
  %1372 = vmatprep.subr.mxu0 0.0
  %v1373 = vand.u32 %v1113, 4294901760
  %1374 = vmatpush1.msra.mxu0 %v1373
  %1375 = vmatprep.subr.mxu0 0.0
  %v1376 = vand.u32 %v1114, 4294901760
  %1377 = vmatpush1.msra.mxu0 %v1376
  %1378 = vmatprep.subr.mxu0 0.0
  %v1379 = vand.u32 %v1115, 4294901760
  %1380 = vmatpush1.msra.mxu0 %v1379
  %1381 = vmatprep.subr.mxu0 0.0
  %1382 = vmatpush1.msra.mxu0 0.0
  %1383 = vmatprep.subr.mxu0 0.0
  %1384 = vmatpush1.msra.mxu0 0.0
  %1385 = vmatprep.subr.mxu0 0.0
  %1386 = vmatpush1.msra.mxu0 0.0
  %1387 = vmatprep.subr.mxu0 0.0
  %1388 = vmatpush1.msra.mxu0 0.0
  %1389 = vmatprep.subr.mxu0 0.0
  %1390 = vmatpush1.msra.mxu0 0.0
  %1391 = vmatprep.subr.mxu0 0.0
  %1392 = vmatpush1.msra.mxu0 0.0
  %1393 = vmatprep.subr.mxu0 0.0
  %1394 = vmatpush1.msra.mxu0 0.0
  %1395 = vmatprep.subr.mxu0 0.0
  %1396 = vmatpush1.msra.mxu0 0.0
  %1397 = vmatprep.subr.mxu0 0.0
  %1398 = vmatpush1.msra.mxu0 0.0
  %1399 = vmatprep.subr.mxu0 0.0
  %1400 = vmatpush1.msra.mxu0 0.0
  %1401 = vmatprep.subr.mxu0 0.0
  %1402 = vmatpush1.msra.mxu0 0.0
  %1403 = vmatprep.subr.mxu0 0.0
  %1404 = vmatpush1.msra.mxu0 0.0
  %1405 = vmatprep.subr.mxu0 0.0
  %1406 = vmatpush1.msra.mxu0 0.0
  %1407 = vmatprep.subr.mxu0 0.0
  %1408 = vmatpush1.msra.mxu0 0.0
  %1409 = vmatprep.subr.mxu0 0.0
  %1410 = vmatpush1.msra.mxu0 0.0
  %1411 = vmatprep.subr.mxu0 0.0
  %1412 = vmatpush1.msra.mxu0 0.0
  %1413 = vmatprep.subr.mxu0 0.0
  %1414 = vmatpush1.msra.mxu0 0.0
  %1415 = vmatprep.subr.mxu0 0.0
  %1416 = vmatpush1.msra.mxu0 0.0
  %1417 = vmatprep.subr.mxu0 0.0
  %1418 = vmatpush1.msra.mxu0 0.0
  %1419 = vmatprep.subr.mxu0 0.0
  %1420 = vmatpush1.msra.mxu0 0.0
  %1421 = vmatprep.subr.mxu0 0.0
  %1422 = vmatpush1.msra.mxu0 0.0
  %1423 = vmatprep.subr.mxu0 0.0
  %1424 = vmatpush1.msra.mxu0 0.0
  %1425 = vmatprep.subr.mxu0 0.0
  %1426 = vmatpush1.msra.mxu0 0.0
  %1427 = vmatprep.subr.mxu0 0.0
  %1428 = vmatpush1.msra.mxu0 0.0
  %1429 = vmatprep.subr.mxu0 0.0
  %1430 = vmatpush1.msra.mxu0 0.0
  %1431 = vmatprep.subr.mxu0 0.0
  %1432 = vmatpush1.msra.mxu0 0.0
  %1433 = vmatprep.subr.mxu0 0.0
  %1434 = vmatpush1.msra.mxu0 0.0
  %1435 = vmatprep.subr.mxu0 0.0
  %1436 = vmatpush1.msra.mxu0 0.0
  %1437 = vmatprep.mubr.f32.mxu0 0.0
  %v1438 = vand.u32 %v1117, 4294901760
  %v1439 = vsub.f32 %v1117, %v1438
  %v1440 = vand.u32 %v1439, 4294901760
  %1441 = vmatmul.mubr.f32.gmra.mrb[0].mxu0 %v1440
  %v1442 = vpop.f32.mrb[0].mxu0
  %v1443 = vadd.f32 %v1366, %v1442
  %v1444 = vpop.f32.mrb[0].mxu0
  %1445 = vdwg.mxu0
  %1446 = vmatprep.subr.mxu0 0.0
  %v1447 = vand.u32 %v1112, 4294901760
  %v1448 = vsub.f32 %v1112, %v1447
  %v1449 = vand.u32 %v1448, 4294901760
  %1450 = vmatpush1.msra.mxu0 %v1449
  %1451 = vmatprep.subr.mxu0 0.0
  %v1452 = vand.u32 %v1113, 4294901760
  %v1453 = vsub.f32 %v1113, %v1452
  %v1454 = vand.u32 %v1453, 4294901760
  %1455 = vmatpush1.msra.mxu0 %v1454
  %1456 = vmatprep.subr.mxu0 0.0
  %v1457 = vand.u32 %v1114, 4294901760
  %v1458 = vsub.f32 %v1114, %v1457
  %v1459 = vand.u32 %v1458, 4294901760
  %1460 = vmatpush1.msra.mxu0 %v1459
  %1461 = vmatprep.subr.mxu0 0.0
  %v1462 = vand.u32 %v1115, 4294901760
  %v1463 = vsub.f32 %v1115, %v1462
  %v1464 = vand.u32 %v1463, 4294901760
  %1465 = vmatpush1.msra.mxu0 %v1464
  %1466 = vmatprep.subr.mxu0 0.0
  %1467 = vmatpush1.msra.mxu0 0.0
  %1468 = vmatprep.subr.mxu0 0.0
  %1469 = vmatpush1.msra.mxu0 0.0
  %1470 = vmatprep.subr.mxu0 0.0
  %1471 = vmatpush1.msra.mxu0 0.0
  %1472 = vmatprep.subr.mxu0 0.0
  %1473 = vmatpush1.msra.mxu0 0.0
  %1474 = vmatprep.subr.mxu0 0.0
  %1475 = vmatpush1.msra.mxu0 0.0
  %1476 = vmatprep.subr.mxu0 0.0
  %1477 = vmatpush1.msra.mxu0 0.0
  %1478 = vmatprep.subr.mxu0 0.0
  %1479 = vmatpush1.msra.mxu0 0.0
  %1480 = vmatprep.subr.mxu0 0.0
  %1481 = vmatpush1.msra.mxu0 0.0
  %1482 = vmatprep.subr.mxu0 0.0
  %1483 = vmatpush1.msra.mxu0 0.0
  %1484 = vmatprep.subr.mxu0 0.0
  %1485 = vmatpush1.msra.mxu0 0.0
  %1486 = vmatprep.subr.mxu0 0.0
  %1487 = vmatpush1.msra.mxu0 0.0
  %1488 = vmatprep.subr.mxu0 0.0
  %1489 = vmatpush1.msra.mxu0 0.0
  %1490 = vmatprep.subr.mxu0 0.0
  %1491 = vmatpush1.msra.mxu0 0.0
  %1492 = vmatprep.subr.mxu0 0.0
  %1493 = vmatpush1.msra.mxu0 0.0
  %1494 = vmatprep.subr.mxu0 0.0
  %1495 = vmatpush1.msra.mxu0 0.0
  %1496 = vmatprep.subr.mxu0 0.0
  %1497 = vmatpush1.msra.mxu0 0.0
  %1498 = vmatprep.subr.mxu0 0.0
  %1499 = vmatpush1.msra.mxu0 0.0
  %1500 = vmatprep.subr.mxu0 0.0
  %1501 = vmatpush1.msra.mxu0 0.0
  %1502 = vmatprep.subr.mxu0 0.0
  %1503 = vmatpush1.msra.mxu0 0.0
  %1504 = vmatprep.subr.mxu0 0.0
  %1505 = vmatpush1.msra.mxu0 0.0
  %1506 = vmatprep.subr.mxu0 0.0
  %1507 = vmatpush1.msra.mxu0 0.0
  %1508 = vmatprep.subr.mxu0 0.0
  %1509 = vmatpush1.msra.mxu0 0.0
  %1510 = vmatprep.subr.mxu0 0.0
  %1511 = vmatpush1.msra.mxu0 0.0
  %1512 = vmatprep.subr.mxu0 0.0
  %1513 = vmatpush1.msra.mxu0 0.0
  %1514 = vmatprep.subr.mxu0 0.0
  %1515 = vmatpush1.msra.mxu0 0.0
  %1516 = vmatprep.subr.mxu0 0.0
  %1517 = vmatpush1.msra.mxu0 0.0
  %1518 = vmatprep.subr.mxu0 0.0
  %1519 = vmatpush1.msra.mxu0 0.0
  %1520 = vmatprep.subr.mxu0 0.0
  %1521 = vmatpush1.msra.mxu0 0.0
  %1522 = vmatprep.mubr.f32.mxu0 0.0
  %v1523 = vand.u32 %v1117, 4294901760
  %1524 = vmatmul.mubr.f32.gmra.mrb[0].mxu0 %v1523
  %v1525 = vpop.f32.mrb[0].mxu0
  %v1526 = vadd.f32 %v1443, %v1525
  %v1527 = vpop.f32.mrb[0].mxu0
  %1528 = vdwg.mxu0
  %1529 = vmatprep.subr.mxu0 0.0
  %v1530 = vand.u32 %v1112, 4294901760
  %1531 = vmatpush1.msra.mxu0 %v1530
  %1532 = vmatprep.subr.mxu0 0.0
  %v1533 = vand.u32 %v1113, 4294901760
  %1534 = vmatpush1.msra.mxu0 %v1533
  %1535 = vmatprep.subr.mxu0 0.0
  %v1536 = vand.u32 %v1114, 4294901760
  %1537 = vmatpush1.msra.mxu0 %v1536
  %1538 = vmatprep.subr.mxu0 0.0
  %v1539 = vand.u32 %v1115, 4294901760
  %1540 = vmatpush1.msra.mxu0 %v1539
  %1541 = vmatprep.subr.mxu0 0.0
  %1542 = vmatpush1.msra.mxu0 0.0
  %1543 = vmatprep.subr.mxu0 0.0
  %1544 = vmatpush1.msra.mxu0 0.0
  %1545 = vmatprep.subr.mxu0 0.0
  %1546 = vmatpush1.msra.mxu0 0.0
  %1547 = vmatprep.subr.mxu0 0.0
  %1548 = vmatpush1.msra.mxu0 0.0
  %1549 = vmatprep.subr.mxu0 0.0
  %1550 = vmatpush1.msra.mxu0 0.0
  %1551 = vmatprep.subr.mxu0 0.0
  %1552 = vmatpush1.msra.mxu0 0.0
  %1553 = vmatprep.subr.mxu0 0.0
  %1554 = vmatpush1.msra.mxu0 0.0
  %1555 = vmatprep.subr.mxu0 0.0
  %1556 = vmatpush1.msra.mxu0 0.0
  %1557 = vmatprep.subr.mxu0 0.0
  %1558 = vmatpush1.msra.mxu0 0.0
  %1559 = vmatprep.subr.mxu0 0.0
  %1560 = vmatpush1.msra.mxu0 0.0
  %1561 = vmatprep.subr.mxu0 0.0
  %1562 = vmatpush1.msra.mxu0 0.0
  %1563 = vmatprep.subr.mxu0 0.0
  %1564 = vmatpush1.msra.mxu0 0.0
  %1565 = vmatprep.subr.mxu0 0.0
  %1566 = vmatpush1.msra.mxu0 0.0
  %1567 = vmatprep.subr.mxu0 0.0
  %1568 = vmatpush1.msra.mxu0 0.0
  %1569 = vmatprep.subr.mxu0 0.0
  %1570 = vmatpush1.msra.mxu0 0.0
  %1571 = vmatprep.subr.mxu0 0.0
  %1572 = vmatpush1.msra.mxu0 0.0
  %1573 = vmatprep.subr.mxu0 0.0
  %1574 = vmatpush1.msra.mxu0 0.0
  %1575 = vmatprep.subr.mxu0 0.0
  %1576 = vmatpush1.msra.mxu0 0.0
  %1577 = vmatprep.subr.mxu0 0.0
  %1578 = vmatpush1.msra.mxu0 0.0
  %1579 = vmatprep.subr.mxu0 0.0
  %1580 = vmatpush1.msra.mxu0 0.0
  %1581 = vmatprep.subr.mxu0 0.0
  %1582 = vmatpush1.msra.mxu0 0.0
  %1583 = vmatprep.subr.mxu0 0.0
  %1584 = vmatpush1.msra.mxu0 0.0
  %1585 = vmatprep.subr.mxu0 0.0
  %1586 = vmatpush1.msra.mxu0 0.0
  %1587 = vmatprep.subr.mxu0 0.0
  %1588 = vmatpush1.msra.mxu0 0.0
  %1589 = vmatprep.subr.mxu0 0.0
  %1590 = vmatpush1.msra.mxu0 0.0
  %1591 = vmatprep.subr.mxu0 0.0
  %1592 = vmatpush1.msra.mxu0 0.0
  %1593 = vmatprep.subr.mxu0 0.0
  %1594 = vmatpush1.msra.mxu0 0.0
  %1595 = vmatprep.subr.mxu0 0.0
  %1596 = vmatpush1.msra.mxu0 0.0
  %1597 = vmatprep.mubr.f32.mxu0 0.0
  %v1598 = vand.u32 %v1117, 4294901760
  %1599 = vmatmul.mubr.f32.gmra.mrb[0].mxu0 %v1598
  %v1600 = vpop.f32.mrb[0].mxu0
  %v1601 = vadd.f32 %v1526, %v1600
  %v1602 = vpop.f32.mrb[0].mxu0
  %1603 = vdwg.mxu0
  %v1612 = vsel %vm739, %v1066, %v1059
  %v1613 = vsel %vm741, %v1073, %v1612
  %v1614 = vsel %vm743, %v1080, %v1613
  %v1615 = vsel %vm745, %v1087, %v1614
  %v1616 = vsel %vm747, %v1094, %v1615
  %v1617 = vsel %vm749, %v1101, %v1616
  %v1618 = vsel %vm751, %v1108, %v1617
  %v1619 = vsel %vm1052, %v1618, 0
  %1621 = vmatprep.subr.mxu0 0.0
  %v1622 = vand.u32 %v1109, 4294901760
  %1623 = vmatpush1.msra.mxu0 %v1622
  %1624 = vmatprep.subr.mxu0 0.0
  %v1625 = vand.u32 %v1110, 4294901760
  %1626 = vmatpush1.msra.mxu0 %v1625
  %1627 = vmatprep.subr.mxu0 0.0
  %1628 = vmatpush1.msra.mxu0 0.0
  %1629 = vmatprep.subr.mxu0 0.0
  %1630 = vmatpush1.msra.mxu0 0.0
  %1631 = vmatprep.subr.mxu0 0.0
  %1632 = vmatpush1.msra.mxu0 0.0
  %1633 = vmatprep.subr.mxu0 0.0
  %1634 = vmatpush1.msra.mxu0 0.0
  %1635 = vmatprep.subr.mxu0 0.0
  %1636 = vmatpush1.msra.mxu0 0.0
  %1637 = vmatprep.subr.mxu0 0.0
  %1638 = vmatpush1.msra.mxu0 0.0
  %1639 = vmatprep.subr.mxu0 0.0
  %1640 = vmatpush1.msra.mxu0 0.0
  %1641 = vmatprep.subr.mxu0 0.0
  %1642 = vmatpush1.msra.mxu0 0.0
  %1643 = vmatprep.subr.mxu0 0.0
  %1644 = vmatpush1.msra.mxu0 0.0
  %1645 = vmatprep.subr.mxu0 0.0
  %1646 = vmatpush1.msra.mxu0 0.0
  %1647 = vmatprep.subr.mxu0 0.0
  %1648 = vmatpush1.msra.mxu0 0.0
  %1649 = vmatprep.subr.mxu0 0.0
  %1650 = vmatpush1.msra.mxu0 0.0
  %1651 = vmatprep.subr.mxu0 0.0
  %1652 = vmatpush1.msra.mxu0 0.0
  %1653 = vmatprep.subr.mxu0 0.0
  %1654 = vmatpush1.msra.mxu0 0.0
  %1655 = vmatprep.subr.mxu0 0.0
  %1656 = vmatpush1.msra.mxu0 0.0
  %1657 = vmatprep.subr.mxu0 0.0
  %1658 = vmatpush1.msra.mxu0 0.0
  %1659 = vmatprep.subr.mxu0 0.0
  %1660 = vmatpush1.msra.mxu0 0.0
  %1661 = vmatprep.subr.mxu0 0.0
  %1662 = vmatpush1.msra.mxu0 0.0
  %1663 = vmatprep.subr.mxu0 0.0
  %1664 = vmatpush1.msra.mxu0 0.0
  %1665 = vmatprep.subr.mxu0 0.0
  %1666 = vmatpush1.msra.mxu0 0.0
  %1667 = vmatprep.subr.mxu0 0.0
  %1668 = vmatpush1.msra.mxu0 0.0
  %1669 = vmatprep.subr.mxu0 0.0
  %1670 = vmatpush1.msra.mxu0 0.0
  %1671 = vmatprep.subr.mxu0 0.0
  %1672 = vmatpush1.msra.mxu0 0.0
  %1673 = vmatprep.subr.mxu0 0.0
  %1674 = vmatpush1.msra.mxu0 0.0
  %1675 = vmatprep.subr.mxu0 0.0
  %1676 = vmatpush1.msra.mxu0 0.0
  %1677 = vmatprep.subr.mxu0 0.0
  %1678 = vmatpush1.msra.mxu0 0.0
  %1679 = vmatprep.subr.mxu0 0.0
  %1680 = vmatpush1.msra.mxu0 0.0
  %1681 = vmatprep.subr.mxu0 0.0
  %1682 = vmatpush1.msra.mxu0 0.0
  %1683 = vmatprep.subr.mxu0 0.0
  %1684 = vmatpush1.msra.mxu0 0.0
  %1685 = vmatprep.subr.mxu0 0.0
  %1686 = vmatpush1.msra.mxu0 0.0
  %1687 = vmatprep.mubr.f32.mxu0 0.0
  %v1688 = vand.u32 %v1619, 4294901760
  %v1689 = vsub.f32 %v1619, %v1688
  %v1690 = vand.u32 %v1689, 4294901760
  %v1691 = vsub.f32 %v1689, %v1690
  %v1692 = vand.u32 %v1691, 4294901760
  %1693 = vmatmul.mubr.f32.gmra.mrb[0].mxu0 %v1692
  %v1694 = vpop.f32.mrb[0].mxu0
  %v1695 = vadd.f32 %v1601, %v1694
  %v1696 = vpop.f32.mrb[0].mxu0
  %1697 = vdwg.mxu0
  %1698 = vmatprep.subr.mxu0 0.0
  %v1699 = vand.u32 %v1109, 4294901760
  %v1700 = vsub.f32 %v1109, %v1699
  %v1701 = vand.u32 %v1700, 4294901760
  %v1702 = vsub.f32 %v1700, %v1701
  %v1703 = vand.u32 %v1702, 4294901760
  %1704 = vmatpush1.msra.mxu0 %v1703
  %1705 = vmatprep.subr.mxu0 0.0
  %v1706 = vand.u32 %v1110, 4294901760
  %v1707 = vsub.f32 %v1110, %v1706
  %v1708 = vand.u32 %v1707, 4294901760
  %v1709 = vsub.f32 %v1707, %v1708
  %v1710 = vand.u32 %v1709, 4294901760
  %1711 = vmatpush1.msra.mxu0 %v1710
  %1712 = vmatprep.subr.mxu0 0.0
  %1713 = vmatpush1.msra.mxu0 0.0
  %1714 = vmatprep.subr.mxu0 0.0
  %1715 = vmatpush1.msra.mxu0 0.0
  %1716 = vmatprep.subr.mxu0 0.0
  %1717 = vmatpush1.msra.mxu0 0.0
  %1718 = vmatprep.subr.mxu0 0.0
  %1719 = vmatpush1.msra.mxu0 0.0
  %1720 = vmatprep.subr.mxu0 0.0
  %1721 = vmatpush1.msra.mxu0 0.0
  %1722 = vmatprep.subr.mxu0 0.0
  %1723 = vmatpush1.msra.mxu0 0.0
  %1724 = vmatprep.subr.mxu0 0.0
  %1725 = vmatpush1.msra.mxu0 0.0
  %1726 = vmatprep.subr.mxu0 0.0
  %1727 = vmatpush1.msra.mxu0 0.0
  %1728 = vmatprep.subr.mxu0 0.0
  %1729 = vmatpush1.msra.mxu0 0.0
  %1730 = vmatprep.subr.mxu0 0.0
  %1731 = vmatpush1.msra.mxu0 0.0
  %1732 = vmatprep.subr.mxu0 0.0
  %1733 = vmatpush1.msra.mxu0 0.0
  %1734 = vmatprep.subr.mxu0 0.0
  %1735 = vmatpush1.msra.mxu0 0.0
  %1736 = vmatprep.subr.mxu0 0.0
  %1737 = vmatpush1.msra.mxu0 0.0
  %1738 = vmatprep.subr.mxu0 0.0
  %1739 = vmatpush1.msra.mxu0 0.0
  %1740 = vmatprep.subr.mxu0 0.0
  %1741 = vmatpush1.msra.mxu0 0.0
  %1742 = vmatprep.subr.mxu0 0.0
  %1743 = vmatpush1.msra.mxu0 0.0
  %1744 = vmatprep.subr.mxu0 0.0
  %1745 = vmatpush1.msra.mxu0 0.0
  %1746 = vmatprep.subr.mxu0 0.0
  %1747 = vmatpush1.msra.mxu0 0.0
  %1748 = vmatprep.subr.mxu0 0.0
  %1749 = vmatpush1.msra.mxu0 0.0
  %1750 = vmatprep.subr.mxu0 0.0
  %1751 = vmatpush1.msra.mxu0 0.0
  %1752 = vmatprep.subr.mxu0 0.0
  %1753 = vmatpush1.msra.mxu0 0.0
  %1754 = vmatprep.subr.mxu0 0.0
  %1755 = vmatpush1.msra.mxu0 0.0
  %1756 = vmatprep.subr.mxu0 0.0
  %1757 = vmatpush1.msra.mxu0 0.0
  %1758 = vmatprep.subr.mxu0 0.0
  %1759 = vmatpush1.msra.mxu0 0.0
  %1760 = vmatprep.subr.mxu0 0.0
  %1761 = vmatpush1.msra.mxu0 0.0
  %1762 = vmatprep.subr.mxu0 0.0
  %1763 = vmatpush1.msra.mxu0 0.0
  %1764 = vmatprep.subr.mxu0 0.0
  %1765 = vmatpush1.msra.mxu0 0.0
  %1766 = vmatprep.subr.mxu0 0.0
  %1767 = vmatpush1.msra.mxu0 0.0
  %1768 = vmatprep.subr.mxu0 0.0
  %1769 = vmatpush1.msra.mxu0 0.0
  %1770 = vmatprep.subr.mxu0 0.0
  %1771 = vmatpush1.msra.mxu0 0.0
  %1772 = vmatprep.mubr.f32.mxu0 0.0
  %v1773 = vand.u32 %v1619, 4294901760
  %1774 = vmatmul.mubr.f32.gmra.mrb[0].mxu0 %v1773
  %v1775 = vpop.f32.mrb[0].mxu0
  %v1776 = vadd.f32 %v1695, %v1775
  %v1777 = vpop.f32.mrb[0].mxu0
  %1778 = vdwg.mxu0
  %1779 = vmatprep.subr.mxu0 0.0
  %v1780 = vand.u32 %v1109, 4294901760
  %v1781 = vsub.f32 %v1109, %v1780
  %1782 = vmatpush1.msra.mxu0 %v1781
  %1783 = vmatprep.subr.mxu0 0.0
  %v1784 = vand.u32 %v1110, 4294901760
  %v1785 = vsub.f32 %v1110, %v1784
  %1786 = vmatpush1.msra.mxu0 %v1785
  %1787 = vmatprep.subr.mxu0 0.0
  %1788 = vmatpush1.msra.mxu0 0.0
  %1789 = vmatprep.subr.mxu0 0.0
  %1790 = vmatpush1.msra.mxu0 0.0
  %1791 = vmatprep.subr.mxu0 0.0
  %1792 = vmatpush1.msra.mxu0 0.0
  %1793 = vmatprep.subr.mxu0 0.0
  %1794 = vmatpush1.msra.mxu0 0.0
  %1795 = vmatprep.subr.mxu0 0.0
  %1796 = vmatpush1.msra.mxu0 0.0
  %1797 = vmatprep.subr.mxu0 0.0
  %1798 = vmatpush1.msra.mxu0 0.0
  %1799 = vmatprep.subr.mxu0 0.0
  %1800 = vmatpush1.msra.mxu0 0.0
  %1801 = vmatprep.subr.mxu0 0.0
  %1802 = vmatpush1.msra.mxu0 0.0
  %1803 = vmatprep.subr.mxu0 0.0
  %1804 = vmatpush1.msra.mxu0 0.0
  %1805 = vmatprep.subr.mxu0 0.0
  %1806 = vmatpush1.msra.mxu0 0.0
  %1807 = vmatprep.subr.mxu0 0.0
  %1808 = vmatpush1.msra.mxu0 0.0
  %1809 = vmatprep.subr.mxu0 0.0
  %1810 = vmatpush1.msra.mxu0 0.0
  %1811 = vmatprep.subr.mxu0 0.0
  %1812 = vmatpush1.msra.mxu0 0.0
  %1813 = vmatprep.subr.mxu0 0.0
  %1814 = vmatpush1.msra.mxu0 0.0
  %1815 = vmatprep.subr.mxu0 0.0
  %1816 = vmatpush1.msra.mxu0 0.0
  %1817 = vmatprep.subr.mxu0 0.0
  %1818 = vmatpush1.msra.mxu0 0.0
  %1819 = vmatprep.subr.mxu0 0.0
  %1820 = vmatpush1.msra.mxu0 0.0
  %1821 = vmatprep.subr.mxu0 0.0
  %1822 = vmatpush1.msra.mxu0 0.0
  %1823 = vmatprep.subr.mxu0 0.0
  %1824 = vmatpush1.msra.mxu0 0.0
  %1825 = vmatprep.subr.mxu0 0.0
  %1826 = vmatpush1.msra.mxu0 0.0
  %1827 = vmatprep.subr.mxu0 0.0
  %1828 = vmatpush1.msra.mxu0 0.0
  %1829 = vmatprep.subr.mxu0 0.0
  %1830 = vmatpush1.msra.mxu0 0.0
  %1831 = vmatprep.subr.mxu0 0.0
  %1832 = vmatpush1.msra.mxu0 0.0
  %1833 = vmatprep.subr.mxu0 0.0
  %1834 = vmatpush1.msra.mxu0 0.0
  %1835 = vmatprep.subr.mxu0 0.0
  %1836 = vmatpush1.msra.mxu0 0.0
  %1837 = vmatprep.subr.mxu0 0.0
  %1838 = vmatpush1.msra.mxu0 0.0
  %1839 = vmatprep.subr.mxu0 0.0
  %1840 = vmatpush1.msra.mxu0 0.0
  %1841 = vmatprep.subr.mxu0 0.0
  %1842 = vmatpush1.msra.mxu0 0.0
  %1843 = vmatprep.subr.mxu0 0.0
  %1844 = vmatpush1.msra.mxu0 0.0
  %1845 = vmatprep.subr.mxu0 0.0
  %1846 = vmatpush1.msra.mxu0 0.0
  %1847 = vmatprep.mubr.f32.mxu0 0.0
  %v1848 = vand.u32 %v1619, 4294901760
  %v1849 = vsub.f32 %v1619, %v1848
  %1850 = vmatmul.mubr.f32.gmra.mrb[0].mxu0 %v1849
  %v1851 = vpop.f32.mrb[0].mxu0
  %v1852 = vadd.f32 %v1776, %v1851
  %v1853 = vpop.f32.mrb[0].mxu0
  %1854 = vdwg.mxu0
  %1855 = vmatprep.subr.mxu0 0.0
  %v1856 = vand.u32 %v1109, 4294901760
  %1857 = vmatpush1.msra.mxu0 %v1856
  %1858 = vmatprep.subr.mxu0 0.0
  %v1859 = vand.u32 %v1110, 4294901760
  %1860 = vmatpush1.msra.mxu0 %v1859
  %1861 = vmatprep.subr.mxu0 0.0
  %1862 = vmatpush1.msra.mxu0 0.0
  %1863 = vmatprep.subr.mxu0 0.0
  %1864 = vmatpush1.msra.mxu0 0.0
  %1865 = vmatprep.subr.mxu0 0.0
  %1866 = vmatpush1.msra.mxu0 0.0
  %1867 = vmatprep.subr.mxu0 0.0
  %1868 = vmatpush1.msra.mxu0 0.0
  %1869 = vmatprep.subr.mxu0 0.0
  %1870 = vmatpush1.msra.mxu0 0.0
  %1871 = vmatprep.subr.mxu0 0.0
  %1872 = vmatpush1.msra.mxu0 0.0
  %1873 = vmatprep.subr.mxu0 0.0
  %1874 = vmatpush1.msra.mxu0 0.0
  %1875 = vmatprep.subr.mxu0 0.0
  %1876 = vmatpush1.msra.mxu0 0.0
  %1877 = vmatprep.subr.mxu0 0.0
  %1878 = vmatpush1.msra.mxu0 0.0
  %1879 = vmatprep.subr.mxu0 0.0
  %1880 = vmatpush1.msra.mxu0 0.0
  %1881 = vmatprep.subr.mxu0 0.0
  %1882 = vmatpush1.msra.mxu0 0.0
  %1883 = vmatprep.subr.mxu0 0.0
  %1884 = vmatpush1.msra.mxu0 0.0
  %1885 = vmatprep.subr.mxu0 0.0
  %1886 = vmatpush1.msra.mxu0 0.0
  %1887 = vmatprep.subr.mxu0 0.0
  %1888 = vmatpush1.msra.mxu0 0.0
  %1889 = vmatprep.subr.mxu0 0.0
  %1890 = vmatpush1.msra.mxu0 0.0
  %1891 = vmatprep.subr.mxu0 0.0
  %1892 = vmatpush1.msra.mxu0 0.0
  %1893 = vmatprep.subr.mxu0 0.0
  %1894 = vmatpush1.msra.mxu0 0.0
  %1895 = vmatprep.subr.mxu0 0.0
  %1896 = vmatpush1.msra.mxu0 0.0
  %1897 = vmatprep.subr.mxu0 0.0
  %1898 = vmatpush1.msra.mxu0 0.0
  %1899 = vmatprep.subr.mxu0 0.0
  %1900 = vmatpush1.msra.mxu0 0.0
  %1901 = vmatprep.subr.mxu0 0.0
  %1902 = vmatpush1.msra.mxu0 0.0
  %1903 = vmatprep.subr.mxu0 0.0
  %1904 = vmatpush1.msra.mxu0 0.0
  %1905 = vmatprep.subr.mxu0 0.0
  %1906 = vmatpush1.msra.mxu0 0.0
  %1907 = vmatprep.subr.mxu0 0.0
  %1908 = vmatpush1.msra.mxu0 0.0
  %1909 = vmatprep.subr.mxu0 0.0
  %1910 = vmatpush1.msra.mxu0 0.0
  %1911 = vmatprep.subr.mxu0 0.0
  %1912 = vmatpush1.msra.mxu0 0.0
  %1913 = vmatprep.subr.mxu0 0.0
  %1914 = vmatpush1.msra.mxu0 0.0
  %1915 = vmatprep.subr.mxu0 0.0
  %1916 = vmatpush1.msra.mxu0 0.0
  %1917 = vmatprep.subr.mxu0 0.0
  %1918 = vmatpush1.msra.mxu0 0.0
  %1919 = vmatprep.subr.mxu0 0.0
  %1920 = vmatpush1.msra.mxu0 0.0
  %1921 = vmatprep.mubr.f32.mxu0 0.0
  %v1922 = vand.u32 %v1619, 4294901760
  %v1923 = vsub.f32 %v1619, %v1922
  %v1924 = vand.u32 %v1923, 4294901760
  %1925 = vmatmul.mubr.f32.gmra.mrb[0].mxu0 %v1924
  %v1926 = vpop.f32.mrb[0].mxu0
  %v1927 = vadd.f32 %v1852, %v1926
  %v1928 = vpop.f32.mrb[0].mxu0
  %1929 = vdwg.mxu0
  %1930 = vmatprep.subr.mxu0 0.0
  %v1931 = vand.u32 %v1109, 4294901760
  %v1932 = vsub.f32 %v1109, %v1931
  %v1933 = vand.u32 %v1932, 4294901760
  %1934 = vmatpush1.msra.mxu0 %v1933
  %1935 = vmatprep.subr.mxu0 0.0
  %v1936 = vand.u32 %v1110, 4294901760
  %v1937 = vsub.f32 %v1110, %v1936
  %v1938 = vand.u32 %v1937, 4294901760
  %1939 = vmatpush1.msra.mxu0 %v1938
  %1940 = vmatprep.subr.mxu0 0.0
  %1941 = vmatpush1.msra.mxu0 0.0
  %1942 = vmatprep.subr.mxu0 0.0
  %1943 = vmatpush1.msra.mxu0 0.0
  %1944 = vmatprep.subr.mxu0 0.0
  %1945 = vmatpush1.msra.mxu0 0.0
  %1946 = vmatprep.subr.mxu0 0.0
  %1947 = vmatpush1.msra.mxu0 0.0
  %1948 = vmatprep.subr.mxu0 0.0
  %1949 = vmatpush1.msra.mxu0 0.0
  %1950 = vmatprep.subr.mxu0 0.0
  %1951 = vmatpush1.msra.mxu0 0.0
  %1952 = vmatprep.subr.mxu0 0.0
  %1953 = vmatpush1.msra.mxu0 0.0
  %1954 = vmatprep.subr.mxu0 0.0
  %1955 = vmatpush1.msra.mxu0 0.0
  %1956 = vmatprep.subr.mxu0 0.0
  %1957 = vmatpush1.msra.mxu0 0.0
  %1958 = vmatprep.subr.mxu0 0.0
  %1959 = vmatpush1.msra.mxu0 0.0
  %1960 = vmatprep.subr.mxu0 0.0
  %1961 = vmatpush1.msra.mxu0 0.0
  %1962 = vmatprep.subr.mxu0 0.0
  %1963 = vmatpush1.msra.mxu0 0.0
  %1964 = vmatprep.subr.mxu0 0.0
  %1965 = vmatpush1.msra.mxu0 0.0
  %1966 = vmatprep.subr.mxu0 0.0
  %1967 = vmatpush1.msra.mxu0 0.0
  %1968 = vmatprep.subr.mxu0 0.0
  %1969 = vmatpush1.msra.mxu0 0.0
  %1970 = vmatprep.subr.mxu0 0.0
  %1971 = vmatpush1.msra.mxu0 0.0
  %1972 = vmatprep.subr.mxu0 0.0
  %1973 = vmatpush1.msra.mxu0 0.0
  %1974 = vmatprep.subr.mxu0 0.0
  %1975 = vmatpush1.msra.mxu0 0.0
  %1976 = vmatprep.subr.mxu0 0.0
  %1977 = vmatpush1.msra.mxu0 0.0
  %1978 = vmatprep.subr.mxu0 0.0
  %1979 = vmatpush1.msra.mxu0 0.0
  %1980 = vmatprep.subr.mxu0 0.0
  %1981 = vmatpush1.msra.mxu0 0.0
  %1982 = vmatprep.subr.mxu0 0.0
  %1983 = vmatpush1.msra.mxu0 0.0
  %1984 = vmatprep.subr.mxu0 0.0
  %1985 = vmatpush1.msra.mxu0 0.0
  %1986 = vmatprep.subr.mxu0 0.0
  %1987 = vmatpush1.msra.mxu0 0.0
  %1988 = vmatprep.subr.mxu0 0.0
  %1989 = vmatpush1.msra.mxu0 0.0
  %1990 = vmatprep.subr.mxu0 0.0
  %1991 = vmatpush1.msra.mxu0 0.0
  %1992 = vmatprep.subr.mxu0 0.0
  %1993 = vmatpush1.msra.mxu0 0.0
  %1994 = vmatprep.subr.mxu0 0.0
  %1995 = vmatpush1.msra.mxu0 0.0
  %1996 = vmatprep.subr.mxu0 0.0
  %1997 = vmatpush1.msra.mxu0 0.0
  %1998 = vmatprep.subr.mxu0 0.0
  %1999 = vmatpush1.msra.mxu0 0.0
  %2000 = vmatprep.mubr.f32.mxu0 0.0
  %v2001 = vand.u32 %v1619, 4294901760
  %2002 = vmatmul.mubr.f32.gmra.mrb[0].mxu0 %v2001
  %v2003 = vpop.f32.mrb[0].mxu0
  %v2004 = vadd.f32 %v1927, %v2003
  %v2005 = vpop.f32.mrb[0].mxu0
  %2006 = vdwg.mxu0
  %2007 = vmatprep.subr.mxu0 0.0
  %v2008 = vand.u32 %v1109, 4294901760
  %2009 = vmatpush1.msra.mxu0 %v2008
  %2010 = vmatprep.subr.mxu0 0.0
  %v2011 = vand.u32 %v1110, 4294901760
  %2012 = vmatpush1.msra.mxu0 %v2011
  %2013 = vmatprep.subr.mxu0 0.0
  %2014 = vmatpush1.msra.mxu0 0.0
  %2015 = vmatprep.subr.mxu0 0.0
  %2016 = vmatpush1.msra.mxu0 0.0
  %2017 = vmatprep.subr.mxu0 0.0
  %2018 = vmatpush1.msra.mxu0 0.0
  %2019 = vmatprep.subr.mxu0 0.0
  %2020 = vmatpush1.msra.mxu0 0.0
  %2021 = vmatprep.subr.mxu0 0.0
  %2022 = vmatpush1.msra.mxu0 0.0
  %2023 = vmatprep.subr.mxu0 0.0
  %2024 = vmatpush1.msra.mxu0 0.0
  %2025 = vmatprep.subr.mxu0 0.0
  %2026 = vmatpush1.msra.mxu0 0.0
  %2027 = vmatprep.subr.mxu0 0.0
  %2028 = vmatpush1.msra.mxu0 0.0
  %2029 = vmatprep.subr.mxu0 0.0
  %2030 = vmatpush1.msra.mxu0 0.0
  %2031 = vmatprep.subr.mxu0 0.0
  %2032 = vmatpush1.msra.mxu0 0.0
  %2033 = vmatprep.subr.mxu0 0.0
  %2034 = vmatpush1.msra.mxu0 0.0
  %2035 = vmatprep.subr.mxu0 0.0
  %2036 = vmatpush1.msra.mxu0 0.0
  %2037 = vmatprep.subr.mxu0 0.0
  %2038 = vmatpush1.msra.mxu0 0.0
  %2039 = vmatprep.subr.mxu0 0.0
  %2040 = vmatpush1.msra.mxu0 0.0
  %2041 = vmatprep.subr.mxu0 0.0
  %2042 = vmatpush1.msra.mxu0 0.0
  %2043 = vmatprep.subr.mxu0 0.0
  %2044 = vmatpush1.msra.mxu0 0.0
  %2045 = vmatprep.subr.mxu0 0.0
  %2046 = vmatpush1.msra.mxu0 0.0
  %2047 = vmatprep.subr.mxu0 0.0
  %2048 = vmatpush1.msra.mxu0 0.0
  %2049 = vmatprep.subr.mxu0 0.0
  %2050 = vmatpush1.msra.mxu0 0.0
  %2051 = vmatprep.subr.mxu0 0.0
  %2052 = vmatpush1.msra.mxu0 0.0
  %2053 = vmatprep.subr.mxu0 0.0
  %2054 = vmatpush1.msra.mxu0 0.0
  %2055 = vmatprep.subr.mxu0 0.0
  %2056 = vmatpush1.msra.mxu0 0.0
  %2057 = vmatprep.subr.mxu0 0.0
  %2058 = vmatpush1.msra.mxu0 0.0
  %2059 = vmatprep.subr.mxu0 0.0
  %2060 = vmatpush1.msra.mxu0 0.0
  %2061 = vmatprep.subr.mxu0 0.0
  %2062 = vmatpush1.msra.mxu0 0.0
  %2063 = vmatprep.subr.mxu0 0.0
  %2064 = vmatpush1.msra.mxu0 0.0
  %2065 = vmatprep.subr.mxu0 0.0
  %2066 = vmatpush1.msra.mxu0 0.0
  %2067 = vmatprep.subr.mxu0 0.0
  %2068 = vmatpush1.msra.mxu0 0.0
  %2069 = vmatprep.subr.mxu0 0.0
  %2070 = vmatpush1.msra.mxu0 0.0
  %2071 = vmatprep.subr.mxu0 0.0
  %2072 = vmatpush1.msra.mxu0 0.0
  %2073 = vmatprep.mubr.f32.mxu0 0.0
  %v2074 = vand.u32 %v1619, 4294901760
  %2075 = vmatmul.mubr.f32.gmra.mrb[0].mxu0 %v2074
  %v2076 = vpop.f32.mrb[0].mxu0
  %v2077 = vadd.f32 %v2004, %v2076
  %v2078 = vpop.f32.mrb[0].mxu0
  %2079 = vdwg.mxu0
  %v2080 = vld [vmem:[%s9] sm:$0x1]
  %v2082 = vlaneseq
  %v2083 = vshrl.u32 %v2082, 7
  %v2084 = vsub.s32 0, %v2083
  %v2085 = vrot.slane %v2080, %v2084
  %v2087 = vadd.f32 %v2077, %v2085
  %v2088 = vld [vmem:[%s10] sm:$0xff]
  %v2089 = vld [vmem:[%s10 + $0x8] sm:$0xff]
  %v2090 = vld [vmem:[%s10 + $0x10] sm:$0xff]
  %v2091 = vld [vmem:[%s10 + $0x18] sm:$0xff]
  %v2092 = vld [vmem:[%s11] sm:$0x1]
  %v2094 = vlaneseq
  %v2095 = vshrl.u32 %v2094, 7
  %v2096 = vsub.s32 0, %v2095
  %v2097 = vrot.slane %v2092, %v2096
  %2099 = vmatprep.subr.mxu0 0.0
  %v2100 = vand.u32 %v2088, 4294901760
  %2101 = vmatpush1.msra.mxu0 %v2100
  %2102 = vmatprep.subr.mxu0 0.0
  %v2103 = vand.u32 %v2089, 4294901760
  %2104 = vmatpush1.msra.mxu0 %v2103
  %2105 = vmatprep.subr.mxu0 0.0
  %v2106 = vand.u32 %v2090, 4294901760
  %2107 = vmatpush1.msra.mxu0 %v2106
  %2108 = vmatprep.subr.mxu0 0.0
  %v2109 = vand.u32 %v2091, 4294901760
  %2110 = vmatpush1.msra.mxu0 %v2109
  %2111 = vmatprep.subr.mxu0 0.0
  %2112 = vmatpush1.msra.mxu0 0.0
  %2113 = vmatprep.subr.mxu0 0.0
  %2114 = vmatpush1.msra.mxu0 0.0
  %2115 = vmatprep.subr.mxu0 0.0
  %2116 = vmatpush1.msra.mxu0 0.0
  %2117 = vmatprep.subr.mxu0 0.0
  %2118 = vmatpush1.msra.mxu0 0.0
  %2119 = vmatprep.subr.mxu0 0.0
  %2120 = vmatpush1.msra.mxu0 0.0
  %2121 = vmatprep.subr.mxu0 0.0
  %2122 = vmatpush1.msra.mxu0 0.0
  %2123 = vmatprep.subr.mxu0 0.0
  %2124 = vmatpush1.msra.mxu0 0.0
  %2125 = vmatprep.subr.mxu0 0.0
  %2126 = vmatpush1.msra.mxu0 0.0
  %2127 = vmatprep.subr.mxu0 0.0
  %2128 = vmatpush1.msra.mxu0 0.0
  %2129 = vmatprep.subr.mxu0 0.0
  %2130 = vmatpush1.msra.mxu0 0.0
  %2131 = vmatprep.subr.mxu0 0.0
  %2132 = vmatpush1.msra.mxu0 0.0
  %2133 = vmatprep.subr.mxu0 0.0
  %2134 = vmatpush1.msra.mxu0 0.0
  %2135 = vmatprep.subr.mxu0 0.0
  %2136 = vmatpush1.msra.mxu0 0.0
  %2137 = vmatprep.subr.mxu0 0.0
  %2138 = vmatpush1.msra.mxu0 0.0
  %2139 = vmatprep.subr.mxu0 0.0
  %2140 = vmatpush1.msra.mxu0 0.0
  %2141 = vmatprep.subr.mxu0 0.0
  %2142 = vmatpush1.msra.mxu0 0.0
  %2143 = vmatprep.subr.mxu0 0.0
  %2144 = vmatpush1.msra.mxu0 0.0
  %2145 = vmatprep.subr.mxu0 0.0
  %2146 = vmatpush1.msra.mxu0 0.0
  %2147 = vmatprep.subr.mxu0 0.0
  %2148 = vmatpush1.msra.mxu0 0.0
  %2149 = vmatprep.subr.mxu0 0.0
  %2150 = vmatpush1.msra.mxu0 0.0
  %2151 = vmatprep.subr.mxu0 0.0
  %2152 = vmatpush1.msra.mxu0 0.0
  %2153 = vmatprep.subr.mxu0 0.0
  %2154 = vmatpush1.msra.mxu0 0.0
  %2155 = vmatprep.subr.mxu0 0.0
  %2156 = vmatpush1.msra.mxu0 0.0
  %2157 = vmatprep.subr.mxu0 0.0
  %2158 = vmatpush1.msra.mxu0 0.0
  %2159 = vmatprep.subr.mxu0 0.0
  %2160 = vmatpush1.msra.mxu0 0.0
  %2161 = vmatprep.subr.mxu0 0.0
  %2162 = vmatpush1.msra.mxu0 0.0
  %2163 = vmatprep.subr.mxu0 0.0
  %2164 = vmatpush1.msra.mxu0 0.0
  %2165 = vmatprep.subr.mxu0 0.0
  %2166 = vmatpush1.msra.mxu0 0.0
  %2167 = vmatprep.mubr.f32.mxu0 0.0
  %v2168 = vand.u32 %v57, 4294901760
  %v2169 = vsub.f32 %v57, %v2168
  %v2170 = vand.u32 %v2169, 4294901760
  %v2171 = vsub.f32 %v2169, %v2170
  %v2172 = vand.u32 %v2171, 4294901760
  %2173 = vmatmul.mubr.f32.gmra.mrb[0].mxu0 %v2172
  %v2174 = vpop.f32.mrb[0].mxu0
  %v2175 = vadd.f32 %v2097, %v2174
  %v2176 = vpop.f32.mrb[0].mxu0
  %2177 = vdwg.mxu0
  %2178 = vmatprep.subr.mxu0 0.0
  %v2179 = vand.u32 %v2088, 4294901760
  %v2180 = vsub.f32 %v2088, %v2179
  %v2181 = vand.u32 %v2180, 4294901760
  %v2182 = vsub.f32 %v2180, %v2181
  %v2183 = vand.u32 %v2182, 4294901760
  %2184 = vmatpush1.msra.mxu0 %v2183
  %2185 = vmatprep.subr.mxu0 0.0
  %v2186 = vand.u32 %v2089, 4294901760
  %v2187 = vsub.f32 %v2089, %v2186
  %v2188 = vand.u32 %v2187, 4294901760
  %v2189 = vsub.f32 %v2187, %v2188
  %v2190 = vand.u32 %v2189, 4294901760
  %2191 = vmatpush1.msra.mxu0 %v2190
  %2192 = vmatprep.subr.mxu0 0.0
  %v2193 = vand.u32 %v2090, 4294901760
  %v2194 = vsub.f32 %v2090, %v2193
  %v2195 = vand.u32 %v2194, 4294901760
  %v2196 = vsub.f32 %v2194, %v2195
  %v2197 = vand.u32 %v2196, 4294901760
  %2198 = vmatpush1.msra.mxu0 %v2197
  %2199 = vmatprep.subr.mxu0 0.0
  %v2200 = vand.u32 %v2091, 4294901760
  %v2201 = vsub.f32 %v2091, %v2200
  %v2202 = vand.u32 %v2201, 4294901760
  %v2203 = vsub.f32 %v2201, %v2202
  %v2204 = vand.u32 %v2203, 4294901760
  %2205 = vmatpush1.msra.mxu0 %v2204
  %2206 = vmatprep.subr.mxu0 0.0
  %2207 = vmatpush1.msra.mxu0 0.0
  %2208 = vmatprep.subr.mxu0 0.0
  %2209 = vmatpush1.msra.mxu0 0.0
  %2210 = vmatprep.subr.mxu0 0.0
  %2211 = vmatpush1.msra.mxu0 0.0
  %2212 = vmatprep.subr.mxu0 0.0
  %2213 = vmatpush1.msra.mxu0 0.0
  %2214 = vmatprep.subr.mxu0 0.0
  %2215 = vmatpush1.msra.mxu0 0.0
  %2216 = vmatprep.subr.mxu0 0.0
  %2217 = vmatpush1.msra.mxu0 0.0
  %2218 = vmatprep.subr.mxu0 0.0
  %2219 = vmatpush1.msra.mxu0 0.0
  %2220 = vmatprep.subr.mxu0 0.0
  %2221 = vmatpush1.msra.mxu0 0.0
  %2222 = vmatprep.subr.mxu0 0.0
  %2223 = vmatpush1.msra.mxu0 0.0
  %2224 = vmatprep.subr.mxu0 0.0
  %2225 = vmatpush1.msra.mxu0 0.0
  %2226 = vmatprep.subr.mxu0 0.0
  %2227 = vmatpush1.msra.mxu0 0.0
  %2228 = vmatprep.subr.mxu0 0.0
  %2229 = vmatpush1.msra.mxu0 0.0
  %2230 = vmatprep.subr.mxu0 0.0
  %2231 = vmatpush1.msra.mxu0 0.0
  %2232 = vmatprep.subr.mxu0 0.0
  %2233 = vmatpush1.msra.mxu0 0.0
  %2234 = vmatprep.subr.mxu0 0.0
  %2235 = vmatpush1.msra.mxu0 0.0
  %2236 = vmatprep.subr.mxu0 0.0
  %2237 = vmatpush1.msra.mxu0 0.0
  %2238 = vmatprep.subr.mxu0 0.0
  %2239 = vmatpush1.msra.mxu0 0.0
  %2240 = vmatprep.subr.mxu0 0.0
  %2241 = vmatpush1.msra.mxu0 0.0
  %2242 = vmatprep.subr.mxu0 0.0
  %2243 = vmatpush1.msra.mxu0 0.0
  %2244 = vmatprep.subr.mxu0 0.0
  %2245 = vmatpush1.msra.mxu0 0.0
  %2246 = vmatprep.subr.mxu0 0.0
  %2247 = vmatpush1.msra.mxu0 0.0
  %2248 = vmatprep.subr.mxu0 0.0
  %2249 = vmatpush1.msra.mxu0 0.0
  %2250 = vmatprep.subr.mxu0 0.0
  %2251 = vmatpush1.msra.mxu0 0.0
  %2252 = vmatprep.subr.mxu0 0.0
  %2253 = vmatpush1.msra.mxu0 0.0
  %2254 = vmatprep.subr.mxu0 0.0
  %2255 = vmatpush1.msra.mxu0 0.0
  %2256 = vmatprep.subr.mxu0 0.0
  %2257 = vmatpush1.msra.mxu0 0.0
  %2258 = vmatprep.subr.mxu0 0.0
  %2259 = vmatpush1.msra.mxu0 0.0
  %2260 = vmatprep.subr.mxu0 0.0
  %2261 = vmatpush1.msra.mxu0 0.0
  %2262 = vmatprep.mubr.f32.mxu0 0.0
  %v2263 = vand.u32 %v57, 4294901760
  %2264 = vmatmul.mubr.f32.gmra.mrb[0].mxu0 %v2263
  %v2265 = vpop.f32.mrb[0].mxu0
  %v2266 = vadd.f32 %v2175, %v2265
  %v2267 = vpop.f32.mrb[0].mxu0
  %2268 = vdwg.mxu0
  %2269 = vmatprep.subr.mxu0 0.0
  %v2270 = vand.u32 %v2088, 4294901760
  %v2271 = vsub.f32 %v2088, %v2270
  %2272 = vmatpush1.msra.mxu0 %v2271
  %2273 = vmatprep.subr.mxu0 0.0
  %v2274 = vand.u32 %v2089, 4294901760
  %v2275 = vsub.f32 %v2089, %v2274
  %2276 = vmatpush1.msra.mxu0 %v2275
  %2277 = vmatprep.subr.mxu0 0.0
  %v2278 = vand.u32 %v2090, 4294901760
  %v2279 = vsub.f32 %v2090, %v2278
  %2280 = vmatpush1.msra.mxu0 %v2279
  %2281 = vmatprep.subr.mxu0 0.0
  %v2282 = vand.u32 %v2091, 4294901760
  %v2283 = vsub.f32 %v2091, %v2282
  %2284 = vmatpush1.msra.mxu0 %v2283
  %2285 = vmatprep.subr.mxu0 0.0
  %2286 = vmatpush1.msra.mxu0 0.0
  %2287 = vmatprep.subr.mxu0 0.0
  %2288 = vmatpush1.msra.mxu0 0.0
  %2289 = vmatprep.subr.mxu0 0.0
  %2290 = vmatpush1.msra.mxu0 0.0
  %2291 = vmatprep.subr.mxu0 0.0
  %2292 = vmatpush1.msra.mxu0 0.0
  %2293 = vmatprep.subr.mxu0 0.0
  %2294 = vmatpush1.msra.mxu0 0.0
  %2295 = vmatprep.subr.mxu0 0.0
  %2296 = vmatpush1.msra.mxu0 0.0
  %2297 = vmatprep.subr.mxu0 0.0
  %2298 = vmatpush1.msra.mxu0 0.0
  %2299 = vmatprep.subr.mxu0 0.0
  %2300 = vmatpush1.msra.mxu0 0.0
  %2301 = vmatprep.subr.mxu0 0.0
  %2302 = vmatpush1.msra.mxu0 0.0
  %2303 = vmatprep.subr.mxu0 0.0
  %2304 = vmatpush1.msra.mxu0 0.0
  %2305 = vmatprep.subr.mxu0 0.0
  %2306 = vmatpush1.msra.mxu0 0.0
  %2307 = vmatprep.subr.mxu0 0.0
  %2308 = vmatpush1.msra.mxu0 0.0
  %2309 = vmatprep.subr.mxu0 0.0
  %2310 = vmatpush1.msra.mxu0 0.0
  %2311 = vmatprep.subr.mxu0 0.0
  %2312 = vmatpush1.msra.mxu0 0.0
  %2313 = vmatprep.subr.mxu0 0.0
  %2314 = vmatpush1.msra.mxu0 0.0
  %2315 = vmatprep.subr.mxu0 0.0
  %2316 = vmatpush1.msra.mxu0 0.0
  %2317 = vmatprep.subr.mxu0 0.0
  %2318 = vmatpush1.msra.mxu0 0.0
  %2319 = vmatprep.subr.mxu0 0.0
  %2320 = vmatpush1.msra.mxu0 0.0
  %2321 = vmatprep.subr.mxu0 0.0
  %2322 = vmatpush1.msra.mxu0 0.0
  %2323 = vmatprep.subr.mxu0 0.0
  %2324 = vmatpush1.msra.mxu0 0.0
  %2325 = vmatprep.subr.mxu0 0.0
  %2326 = vmatpush1.msra.mxu0 0.0
  %2327 = vmatprep.subr.mxu0 0.0
  %2328 = vmatpush1.msra.mxu0 0.0
  %2329 = vmatprep.subr.mxu0 0.0
  %2330 = vmatpush1.msra.mxu0 0.0
  %2331 = vmatprep.subr.mxu0 0.0
  %2332 = vmatpush1.msra.mxu0 0.0
  %2333 = vmatprep.subr.mxu0 0.0
  %2334 = vmatpush1.msra.mxu0 0.0
  %2335 = vmatprep.subr.mxu0 0.0
  %2336 = vmatpush1.msra.mxu0 0.0
  %2337 = vmatprep.subr.mxu0 0.0
  %2338 = vmatpush1.msra.mxu0 0.0
  %2339 = vmatprep.subr.mxu0 0.0
  %2340 = vmatpush1.msra.mxu0 0.0
  %2341 = vmatprep.mubr.f32.mxu0 0.0
  %v2342 = vand.u32 %v57, 4294901760
  %v2343 = vsub.f32 %v57, %v2342
  %2344 = vmatmul.mubr.f32.gmra.mrb[0].mxu0 %v2343
  %v2345 = vpop.f32.mrb[0].mxu0
  %v2346 = vadd.f32 %v2266, %v2345
  %v2347 = vpop.f32.mrb[0].mxu0
  %2348 = vdwg.mxu0
  %2349 = vmatprep.subr.mxu0 0.0
  %v2350 = vand.u32 %v2088, 4294901760
  %2351 = vmatpush1.msra.mxu0 %v2350
  %2352 = vmatprep.subr.mxu0 0.0
  %v2353 = vand.u32 %v2089, 4294901760
  %2354 = vmatpush1.msra.mxu0 %v2353
  %2355 = vmatprep.subr.mxu0 0.0
  %v2356 = vand.u32 %v2090, 4294901760
  %2357 = vmatpush1.msra.mxu0 %v2356
  %2358 = vmatprep.subr.mxu0 0.0
  %v2359 = vand.u32 %v2091, 4294901760
  %2360 = vmatpush1.msra.mxu0 %v2359
  %2361 = vmatprep.subr.mxu0 0.0
  %2362 = vmatpush1.msra.mxu0 0.0
  %2363 = vmatprep.subr.mxu0 0.0
  %2364 = vmatpush1.msra.mxu0 0.0
  %2365 = vmatprep.subr.mxu0 0.0
  %2366 = vmatpush1.msra.mxu0 0.0
  %2367 = vmatprep.subr.mxu0 0.0
  %2368 = vmatpush1.msra.mxu0 0.0
  %2369 = vmatprep.subr.mxu0 0.0
  %2370 = vmatpush1.msra.mxu0 0.0
  %2371 = vmatprep.subr.mxu0 0.0
  %2372 = vmatpush1.msra.mxu0 0.0
  %2373 = vmatprep.subr.mxu0 0.0
  %2374 = vmatpush1.msra.mxu0 0.0
  %2375 = vmatprep.subr.mxu0 0.0
  %2376 = vmatpush1.msra.mxu0 0.0
  %2377 = vmatprep.subr.mxu0 0.0
  %2378 = vmatpush1.msra.mxu0 0.0
  %2379 = vmatprep.subr.mxu0 0.0
  %2380 = vmatpush1.msra.mxu0 0.0
  %2381 = vmatprep.subr.mxu0 0.0
  %2382 = vmatpush1.msra.mxu0 0.0
  %2383 = vmatprep.subr.mxu0 0.0
  %2384 = vmatpush1.msra.mxu0 0.0
  %2385 = vmatprep.subr.mxu0 0.0
  %2386 = vmatpush1.msra.mxu0 0.0
  %2387 = vmatprep.subr.mxu0 0.0
  %2388 = vmatpush1.msra.mxu0 0.0
  %2389 = vmatprep.subr.mxu0 0.0
  %2390 = vmatpush1.msra.mxu0 0.0
  %2391 = vmatprep.subr.mxu0 0.0
  %2392 = vmatpush1.msra.mxu0 0.0
  %2393 = vmatprep.subr.mxu0 0.0
  %2394 = vmatpush1.msra.mxu0 0.0
  %2395 = vmatprep.subr.mxu0 0.0
  %2396 = vmatpush1.msra.mxu0 0.0
  %2397 = vmatprep.subr.mxu0 0.0
  %2398 = vmatpush1.msra.mxu0 0.0
  %2399 = vmatprep.subr.mxu0 0.0
  %2400 = vmatpush1.msra.mxu0 0.0
  %2401 = vmatprep.subr.mxu0 0.0
  %2402 = vmatpush1.msra.mxu0 0.0
  %2403 = vmatprep.subr.mxu0 0.0
  %2404 = vmatpush1.msra.mxu0 0.0
  %2405 = vmatprep.subr.mxu0 0.0
  %2406 = vmatpush1.msra.mxu0 0.0
  %2407 = vmatprep.subr.mxu0 0.0
  %2408 = vmatpush1.msra.mxu0 0.0
  %2409 = vmatprep.subr.mxu0 0.0
  %2410 = vmatpush1.msra.mxu0 0.0
  %2411 = vmatprep.subr.mxu0 0.0
  %2412 = vmatpush1.msra.mxu0 0.0
  %2413 = vmatprep.subr.mxu0 0.0
  %2414 = vmatpush1.msra.mxu0 0.0
  %2415 = vmatprep.subr.mxu0 0.0
  %2416 = vmatpush1.msra.mxu0 0.0
  %2417 = vmatprep.mubr.f32.mxu0 0.0
  %v2418 = vand.u32 %v57, 4294901760
  %v2419 = vsub.f32 %v57, %v2418
  %v2420 = vand.u32 %v2419, 4294901760
  %2421 = vmatmul.mubr.f32.gmra.mrb[0].mxu0 %v2420
  %v2422 = vpop.f32.mrb[0].mxu0
  %v2423 = vadd.f32 %v2346, %v2422
  %v2424 = vpop.f32.mrb[0].mxu0
  %2425 = vdwg.mxu0
  %2426 = vmatprep.subr.mxu0 0.0
  %v2427 = vand.u32 %v2088, 4294901760
  %v2428 = vsub.f32 %v2088, %v2427
  %v2429 = vand.u32 %v2428, 4294901760
  %2430 = vmatpush1.msra.mxu0 %v2429
  %2431 = vmatprep.subr.mxu0 0.0
  %v2432 = vand.u32 %v2089, 4294901760
  %v2433 = vsub.f32 %v2089, %v2432
  %v2434 = vand.u32 %v2433, 4294901760
  %2435 = vmatpush1.msra.mxu0 %v2434
  %2436 = vmatprep.subr.mxu0 0.0
  %v2437 = vand.u32 %v2090, 4294901760
  %v2438 = vsub.f32 %v2090, %v2437
  %v2439 = vand.u32 %v2438, 4294901760
  %2440 = vmatpush1.msra.mxu0 %v2439
  %2441 = vmatprep.subr.mxu0 0.0
  %v2442 = vand.u32 %v2091, 4294901760
  %v2443 = vsub.f32 %v2091, %v2442
  %v2444 = vand.u32 %v2443, 4294901760
  %2445 = vmatpush1.msra.mxu0 %v2444
  %2446 = vmatprep.subr.mxu0 0.0
  %2447 = vmatpush1.msra.mxu0 0.0
  %2448 = vmatprep.subr.mxu0 0.0
  %2449 = vmatpush1.msra.mxu0 0.0
  %2450 = vmatprep.subr.mxu0 0.0
  %2451 = vmatpush1.msra.mxu0 0.0
  %2452 = vmatprep.subr.mxu0 0.0
  %2453 = vmatpush1.msra.mxu0 0.0
  %2454 = vmatprep.subr.mxu0 0.0
  %2455 = vmatpush1.msra.mxu0 0.0
  %2456 = vmatprep.subr.mxu0 0.0
  %2457 = vmatpush1.msra.mxu0 0.0
  %2458 = vmatprep.subr.mxu0 0.0
  %2459 = vmatpush1.msra.mxu0 0.0
  %2460 = vmatprep.subr.mxu0 0.0
  %2461 = vmatpush1.msra.mxu0 0.0
  %2462 = vmatprep.subr.mxu0 0.0
  %2463 = vmatpush1.msra.mxu0 0.0
  %2464 = vmatprep.subr.mxu0 0.0
  %2465 = vmatpush1.msra.mxu0 0.0
  %2466 = vmatprep.subr.mxu0 0.0
  %2467 = vmatpush1.msra.mxu0 0.0
  %2468 = vmatprep.subr.mxu0 0.0
  %2469 = vmatpush1.msra.mxu0 0.0
  %2470 = vmatprep.subr.mxu0 0.0
  %2471 = vmatpush1.msra.mxu0 0.0
  %2472 = vmatprep.subr.mxu0 0.0
  %2473 = vmatpush1.msra.mxu0 0.0
  %2474 = vmatprep.subr.mxu0 0.0
  %2475 = vmatpush1.msra.mxu0 0.0
  %2476 = vmatprep.subr.mxu0 0.0
  %2477 = vmatpush1.msra.mxu0 0.0
  %2478 = vmatprep.subr.mxu0 0.0
  %2479 = vmatpush1.msra.mxu0 0.0
  %2480 = vmatprep.subr.mxu0 0.0
  %2481 = vmatpush1.msra.mxu0 0.0
  %2482 = vmatprep.subr.mxu0 0.0
  %2483 = vmatpush1.msra.mxu0 0.0
  %2484 = vmatprep.subr.mxu0 0.0
  %2485 = vmatpush1.msra.mxu0 0.0
  %2486 = vmatprep.subr.mxu0 0.0
  %2487 = vmatpush1.msra.mxu0 0.0
  %2488 = vmatprep.subr.mxu0 0.0
  %2489 = vmatpush1.msra.mxu0 0.0
  %2490 = vmatprep.subr.mxu0 0.0
  %2491 = vmatpush1.msra.mxu0 0.0
  %2492 = vmatprep.subr.mxu0 0.0
  %2493 = vmatpush1.msra.mxu0 0.0
  %2494 = vmatprep.subr.mxu0 0.0
  %2495 = vmatpush1.msra.mxu0 0.0
  %2496 = vmatprep.subr.mxu0 0.0
  %2497 = vmatpush1.msra.mxu0 0.0
  %2498 = vmatprep.subr.mxu0 0.0
  %2499 = vmatpush1.msra.mxu0 0.0
  %2500 = vmatprep.subr.mxu0 0.0
  %2501 = vmatpush1.msra.mxu0 0.0
  %2502 = vmatprep.mubr.f32.mxu0 0.0
  %v2503 = vand.u32 %v57, 4294901760
  %2504 = vmatmul.mubr.f32.gmra.mrb[0].mxu0 %v2503
  %v2505 = vpop.f32.mrb[0].mxu0
  %v2506 = vadd.f32 %v2423, %v2505
  %v2507 = vpop.f32.mrb[0].mxu0
  %2508 = vdwg.mxu0
  %2509 = vmatprep.subr.mxu0 0.0
  %v2510 = vand.u32 %v2088, 4294901760
  %2511 = vmatpush1.msra.mxu0 %v2510
  %2512 = vmatprep.subr.mxu0 0.0
  %v2513 = vand.u32 %v2089, 4294901760
  %2514 = vmatpush1.msra.mxu0 %v2513
  %2515 = vmatprep.subr.mxu0 0.0
  %v2516 = vand.u32 %v2090, 4294901760
  %2517 = vmatpush1.msra.mxu0 %v2516
  %2518 = vmatprep.subr.mxu0 0.0
  %v2519 = vand.u32 %v2091, 4294901760
  %2520 = vmatpush1.msra.mxu0 %v2519
  %2521 = vmatprep.subr.mxu0 0.0
  %2522 = vmatpush1.msra.mxu0 0.0
  %2523 = vmatprep.subr.mxu0 0.0
  %2524 = vmatpush1.msra.mxu0 0.0
  %2525 = vmatprep.subr.mxu0 0.0
  %2526 = vmatpush1.msra.mxu0 0.0
  %2527 = vmatprep.subr.mxu0 0.0
  %2528 = vmatpush1.msra.mxu0 0.0
  %2529 = vmatprep.subr.mxu0 0.0
  %2530 = vmatpush1.msra.mxu0 0.0
  %2531 = vmatprep.subr.mxu0 0.0
  %2532 = vmatpush1.msra.mxu0 0.0
  %2533 = vmatprep.subr.mxu0 0.0
  %2534 = vmatpush1.msra.mxu0 0.0
  %2535 = vmatprep.subr.mxu0 0.0
  %2536 = vmatpush1.msra.mxu0 0.0
  %2537 = vmatprep.subr.mxu0 0.0
  %2538 = vmatpush1.msra.mxu0 0.0
  %2539 = vmatprep.subr.mxu0 0.0
  %2540 = vmatpush1.msra.mxu0 0.0
  %2541 = vmatprep.subr.mxu0 0.0
  %2542 = vmatpush1.msra.mxu0 0.0
  %2543 = vmatprep.subr.mxu0 0.0
  %2544 = vmatpush1.msra.mxu0 0.0
  %2545 = vmatprep.subr.mxu0 0.0
  %2546 = vmatpush1.msra.mxu0 0.0
  %2547 = vmatprep.subr.mxu0 0.0
  %2548 = vmatpush1.msra.mxu0 0.0
  %2549 = vmatprep.subr.mxu0 0.0
  %2550 = vmatpush1.msra.mxu0 0.0
  %2551 = vmatprep.subr.mxu0 0.0
  %2552 = vmatpush1.msra.mxu0 0.0
  %2553 = vmatprep.subr.mxu0 0.0
  %2554 = vmatpush1.msra.mxu0 0.0
  %2555 = vmatprep.subr.mxu0 0.0
  %2556 = vmatpush1.msra.mxu0 0.0
  %2557 = vmatprep.subr.mxu0 0.0
  %2558 = vmatpush1.msra.mxu0 0.0
  %2559 = vmatprep.subr.mxu0 0.0
  %2560 = vmatpush1.msra.mxu0 0.0
  %2561 = vmatprep.subr.mxu0 0.0
  %2562 = vmatpush1.msra.mxu0 0.0
  %2563 = vmatprep.subr.mxu0 0.0
  %2564 = vmatpush1.msra.mxu0 0.0
  %2565 = vmatprep.subr.mxu0 0.0
  %2566 = vmatpush1.msra.mxu0 0.0
  %2567 = vmatprep.subr.mxu0 0.0
  %2568 = vmatpush1.msra.mxu0 0.0
  %2569 = vmatprep.subr.mxu0 0.0
  %2570 = vmatpush1.msra.mxu0 0.0
  %2571 = vmatprep.subr.mxu0 0.0
  %2572 = vmatpush1.msra.mxu0 0.0
  %2573 = vmatprep.subr.mxu0 0.0
  %2574 = vmatpush1.msra.mxu0 0.0
  %2575 = vmatprep.subr.mxu0 0.0
  %2576 = vmatpush1.msra.mxu0 0.0
  %2577 = vmatprep.mubr.f32.mxu0 0.0
  %v2578 = vand.u32 %v57, 4294901760
  %2579 = vmatmul.mubr.f32.gmra.mrb[0].mxu0 %v2578
  %v2580 = vpop.f32.mrb[0].mxu0
  %v2581 = vadd.f32 %v2506, %v2580
  %v2582 = vpop.f32.mrb[0].mxu0
  %2583 = vdwg.mxu0
  %v2584 = vadd.f32 %v2087, %v2581
  %v2585 = vxor.u32 %v2584, 2147483648
  %v2586 = vmul.f32 %v2585, 1.442695
  %v2587 = vpow.pop %v2586
  %v2588 = vadd.f32 %v2587, 1.0
  %v2589 = vrcp.pop %v2588
  %v2590 = vmul.f32 1.0, %v2589
  %2592 = vrot.lane.b32.xlu0 %v2581, 64
  %v2593 = vpop.permute.xlu0 %2592
  %v2595 = vmul.f32 %v2590, %v2593
  %2597 = vrot.lane.b32.xlu0 %v2595, 64
  %v2598 = vpop.permute.xlu0 %2597
  %v2600 = vadd.f32 %v2087, %v2598
  %v2601 = vtanh.pop %v2600
  %v2602 = vsub.f32 1.0, %v2590
  %2604 = vrot.lane.b32.xlu0 %v2601, 96
  %v2605 = vpop.permute.xlu0 %2604
  %v2607 = vmul.f32 %v2602, %v2605
  %2608 = vrot.lane.b32.xlu0 %v43, 32
  %v2609 = vpop.permute.xlu0 %2608
  %v2611 = vmul.f32 %v2590, %v2609
  %v2612 = vadd.f32 %v2607, %v2611
  %2614 = vrot.lane.b32.xlu0 %v2612, 96
  %v2615 = vpop.permute.xlu0 %2614
  %2617 = vst.msk [vmem:[%s12] sm:$0xff] %vm55, %v2615
  // Predicated region
  $region50: #{_attention_cell_jit.1} parent=0 // pred_check
    _
  $region51: #{_attention_cell_jit.1} parent=0 // pred_check_branch
    %2619 = sbr.rel (0) target = $region53
  $region52: #{_attention_cell_jit.1} parent=0 // pred_region
    _
  $region53: #{_attention_cell_jit.1} parent=0 // pred_fallthru
    _
  // Predicated region
  $region54: #{_attention_cell_jit.1} parent=0 // pred_check
    _
  $region55: #{_attention_cell_jit.1} parent=0 // pred_check_branch
    %2621 = sbr.rel (0) target = $region57
  $region56: #{_attention_cell_jit.1} parent=0 // pred_region
    _
  $region57: #{_attention_cell_jit.1} parent=0 // pred_fallthru
    _
  // Predicated region
  $region58: #{_attention_cell_jit.1} parent=0 // pred_check
    _
  $region59: #{_attention_cell_jit.1} parent=0 // pred_check_branch
    %2623 = sbr.rel (0) target = $region61
  $region60: #{_attention_cell_jit.1} parent=0 // pred_region
    _
  $region61: #{_attention_cell_jit.1} parent=0 // pred_fallthru
    _
  // Predicated region
  $region62: #{_attention_cell_jit.1} parent=0 // pred_check
    _
  $region63: #{_attention_cell_jit.1} parent=0 // pred_check_branch
    %2625 = sbr.rel (0) target = $region65
  $region64: #{_attention_cell_jit.1} parent=0 // pred_region
    _
  $region65: #{_attention_cell_jit.1} parent=0 // pred_fallthru
    _

</llo_original>
